<compile_context>
chip_gen: v7x
topology: tpu7x:2x2x1
jax: 0.10.0
libtpu: 0.0.40
codegen_flags: <defaults>
</compile_context>

<pallas_src>
import functools

import numpy as np
import jax
import jax.numpy as jnp
from jax.experimental import pallas as pl
from jax.experimental.pallas import tpu as pltpu

_INV_SQRT2 = 0.7071067811865475244
_SQRT_2_OVER_PI = 0.7978845608028654
_UNROLL_MAX_BLOCKS = 4           # <= this: static Python unroll; above: lax.fori_loop


def _gelu_exact(x):
    # PyTorch nn.GELU() default = exact (erf-based) GELU.  erf has no EUP path on TPU
    # (pure VALU polynomial) -- use approx_gelu=True to route through the EUP instead.
    return 0.5 * x * (1.0 + jax.lax.erf(x * _INV_SQRT2))


def _gelu_tanh(x):
    # tanh-form GELU: the transcendental rides the EUP slot, leaving the VALU free.
    return 0.5 * x * (1.0 + jnp.tanh(_SQRT_2_OVER_PI * (x + 0.044715 * x * x * x)))


def _round_up(v, m):
    return ((v + m - 1) // m) * m


def _vmem_capacity_bytes():
    # Per-TensorCore VMEM: 128 MiB on v5e/v6e, 64 MiB on v7x.
    try:
        info = pltpu.get_tpu_info()
        cap = getattr(info, "vmem_capacity_bytes", None)
        if cap:
            return int(cap)
    except Exception:
        pass
    return 128 * 1024 * 1024


def resnet_kernel(x_ref, w_in_ref, b_in_ref, w1s_ref, b1s_ref,
                  w2s_ref, b2s_ref, w_out_ref, b_out_ref, o_ref,
                  *, gelu, unroll_blocks):
    # x_ref: (tm, d_in_p) row tile; weight/bias stacks live fully in VMEM (constant
    # index_map + Buffered(1) -> fetched once, single-buffered across grid steps).
    cdt = w_in_ref.dtype  # matmul-operand dtype (bf16-friendly); accumulation is f32.

    # linear_in + GELU
    h = jnp.dot(x_ref[...], w_in_ref[...], preferred_element_type=jnp.float32)
    h = h + b_in_ref[...].astype(jnp.float32)
    h = gelu(h)  # f32
    # TODO(synk): on v6e/v7x the GELU chain could run in bf16 (2x VALU lane density);
    # kept in f32 so the same kernel stays exact on v5e (no bf16 VPU/EUP).

    num_blocks = w1s_ref.shape[0]

    def block(b, h):
        x0 = h
        t = gelu(h)
        t = jnp.dot(t.astype(cdt), w1s_ref[b], preferred_element_type=jnp.float32)
        t = t + b1s_ref[b].astype(jnp.float32)
        t = gelu(t)
        t = jnp.dot(t.astype(cdt), w2s_ref[b], preferred_element_type=jnp.float32)
        t = t + b2s_ref[b].astype(jnp.float32)
        return x0 + t  # residual()  (same value in train / eval mode)

    if unroll_blocks:
        for b in range(num_blocks):                     # small nb: static unroll
            h = block(b, h)
    else:
        h = jax.lax.fori_loop(0, num_blocks, block, h)  # large nb: bound live ranges

    # linear_out
    out = jnp.dot(h.astype(cdt), w_out_ref[...], preferred_element_type=jnp.float32)
    out = out + b_out_ref[...].astype(jnp.float32)
    o_ref[...] = out.astype(o_ref.dtype)


def resnet_forward(x, params, *, tm=512, approx_gelu=False, compute_dtype=None):
    """Apply the Resnet to x of shape [*, d_in]; returns [*, d_out]."""
    w_in, b_in, w1s, b1s, w2s, b2s, w_out, b_out = params
    d_in, d_hid = w_in.shape
    d_out = w_out.shape[1]
    nb = w1s.shape[0]

    out_dtype = jnp.dtype(w_in.dtype)            # module output dtype follows weights
    cdt = jnp.dtype(compute_dtype) if compute_dtype is not None else out_dtype
    wsz = cdt.itemsize
    bsz = jnp.dtype(jnp.float32).itemsize

    lead = x.shape[:-1]
    M = int(np.prod(lead)) if lead else 1
    xf = x.reshape(M, d_in).astype(cdt)

    # --- lane-dense feature padding (zero padding is exact for this network) ---
    LANE = 128
    d_in_p = _round_up(d_in, LANE)
    d_hid_p = _round_up(d_hid, LANE)
    d_out_p = _round_up(d_out, LANE)
    # TODO(synk): on v6e/v7x (256-wide MXU) pad d_hid to a multiple of 256 when the
    # real d_hid lands just below one; verify via the bundle vmatmul count.

    def pad2(a, r, c, dt):
        return jnp.pad(a.astype(dt), ((0, r - a.shape[0]), (0, c - a.shape[1])))

    def pad3(a, r, c, dt):
        return jnp.pad(a.astype(dt), ((0, 0), (0, r - a.shape[1]), (0, c - a.shape[2])))

    # Weights in compute dtype; biases stay f32 (they are added in f32 in the kernel).
    w_in_p = pad2(w_in, d_in_p, d_hid_p, cdt)
    b_in_p = pad2(b_in, 1, d_hid_p, jnp.float32)
    w1s_p = pad3(w1s, d_hid_p, d_hid_p, cdt)
    b1s_p = pad3(b1s, 1, d_hid_p, jnp.float32)
    w2s_p = pad3(w2s, d_hid_p, d_hid_p, cdt)
    b2s_p = pad3(b2s, 1, d_hid_p, jnp.float32)
    w_out_p = pad2(w_out, d_hid_p, d_out_p, cdt)
    b_out_p = pad2(b_out, 1, d_out_p, jnp.float32)

    w_bytes = (w_in_p.size + w1s_p.size + w2s_p.size + w_out_p.size) * wsz
    b_bytes = (b_in_p.size + b1s_p.size + b2s_p.size + b_out_p.size) * bsz

    # --- generation-aware VMEM budget (v5e/v6e: 128 MiB/TC, v7x: 64 MiB/TC) ---
    vmem_cap = _vmem_capacity_bytes()
    vmem_budget = int(vmem_cap * 0.72)           # ~46 MiB on v7x, ~92 MiB on v5e/v6e
    vmem_limit_cap = int(vmem_cap * 0.85)        # headroom for Mosaic internal scratch

    # --- row tile: large (MXU fill, few grid steps), sublane-aligned, VMEM-budgeted ---
    sub = 8 * max(1, 4 // wsz)                   # 8 rows for f32 tiles, 16 for bf16
    tm_eff = _round_up(min(max(tm, sub), max(M, 1)), sub)

    def vmem_est(t, weight_bufs):
        io = 2 * t * (d_in_p * wsz + d_out_p * out_dtype.itemsize)  # dbl-buffered x/out
        act = 6 * t * d_hid_p * 4                                   # f32 activation tmps
        return weight_bufs * (w_bytes + b_bytes) + io + act

    # Size the tile assuming single-buffered weights (pl.Buffered(1)); the fallback
    # path (default double-buffering) only triggers if Buffered(1) is unsupported.
    while vmem_est(tm_eff, 1) > vmem_budget and tm_eff > sub:
        tm_eff = max(sub, _round_up(tm_eff // 2, sub))
    # TODO(synk): if the 2*nb*d_hid_p^2 weight stack alone exceeds the budget (very
    # large d_hid / num_blocks), stream W1[b]/W2[b] per block via a manual
    # double-buffered DMA (memory_space=pl.ANY + pltpu.make_async_copy) instead.

    Mp = _round_up(M, tm_eff)
    xf = jnp.pad(xf, ((0, Mp - M), (0, d_in_p - d_in)))
    grid = (Mp // tm_eff,)

    flops = 2 * Mp * d_hid_p * (d_in_p + 2 * nb * d_hid_p + d_out_p)
    transcendentals = Mp * d_hid_p * (1 + 2 * nb)
    bytes_accessed = Mp * (d_in_p * wsz + d_out_p * out_dtype.itemsize) + w_bytes + b_bytes

    kernel = functools.partial(
        resnet_kernel,
        gelu=_gelu_tanh if approx_gelu else _gelu_exact,
        unroll_blocks=nb <= _UNROLL_MAX_BLOCKS)

    def call(single_buffer_weights):
        const_kw = {}
        if single_buffer_weights:
            # Constant index_map -> 2-deep pipelining only doubles VMEM; single-buffer.
            const_kw = dict(pipeline_mode=pl.Buffered(1))

        def const_spec(shape):
            return pl.BlockSpec(shape, lambda i: (0,) * len(shape), **const_kw)

        vmem_limit = int(min(
            vmem_limit_cap,
            max(32 * 1024 * 1024,
                int(vmem_est(tm_eff, 1 if single_buffer_weights else 2) * 1.25))))

        return pl.pallas_call(
            kernel,
            out_shape=jax.ShapeDtypeStruct((Mp, d_out_p), out_dtype),
            grid_spec=pltpu.PrefetchScalarGridSpec(
                num_scalar_prefetch=0,
                grid=grid,
                in_specs=[
                    pl.BlockSpec((tm_eff, d_in_p), lambda i: (i, 0)),   # x rows
                    const_spec((d_in_p, d_hid_p)),                      # W_in^T
                    const_spec((1, d_hid_p)),                           # b_in
                    const_spec((nb, d_hid_p, d_hid_p)),                 # W1^T stack
                    const_spec((nb, 1, d_hid_p)),                       # b1 stack
                    const_spec((nb, d_hid_p, d_hid_p)),                 # W2^T stack
                    const_spec((nb, 1, d_hid_p)),                       # b2 stack
                    const_spec((d_hid_p, d_out_p)),                     # W_out^T
                    const_spec((1, d_out_p)),                           # b_out
                ],
                out_specs=pl.BlockSpec((tm_eff, d_out_p), lambda i: (i, 0)),
            ),
            compiler_params=pltpu.CompilerParams(
                # TODO(synk): on v7x use pltpu.CORE_PARALLEL (or pl.core_map over a
                # tensorcore mesh) so the row axis shards across both TensorCores.
                dimension_semantics=("parallel",),
                vmem_limit_bytes=vmem_limit),
            cost_estimate=pl.CostEstimate(
                flops=int(flops),
                transcendentals=int(transcendentals),
                bytes_accessed=int(bytes_accessed)),
        )(xf, w_in_p, b_in_p, w1s_p, b1s_p, w2s_p, b2s_p, w_out_p, b_out_p)

    if hasattr(pl, "Buffered"):
        try:
            out = call(True)
        except Exception:
            out = call(False)   # installed Pallas rejected Buffered(1): double-buffer
    else:
        out = call(False)

    return out[:M, :d_out].reshape(*lead, d_out)


def init_params(key, d_in, d_hid, d_out, num_blocks, dtype=jnp.float32):
    """Deterministic synthetic init matching the PyTorch parameter shapes.

    PyTorch Linear weight is [out, in]; we store the transpose [in, out].  Biases are
    zero (as in the module's __init__).  linear_2 uses init='final' (zeros) in the
    reference; small random weights are used instead so the block path is exercised.
    """
    ks = jax.random.split(key, 4)
    w_in = jax.random.normal(ks[0], (d_in, d_hid), dtype) * (1.0 / np.sqrt(d_in))
    b_in = jnp.zeros((1, d_hid), dtype)
    w1s = jax.random.normal(ks[1], (num_blocks, d_hid, d_hid), dtype) * np.sqrt(2.0 / d_hid)
    b1s = jnp.zeros((num_blocks, 1, d_hid), dtype)
    w2s = jax.random.normal(ks[2], (num_blocks, d_hid, d_hid), dtype) * 0.02
    b2s = jnp.zeros((num_blocks, 1, d_hid), dtype)
    w_out = jax.random.normal(ks[3], (d_hid, d_out), dtype) * (1.0 / np.sqrt(d_hid))
    b_out = jnp.zeros((1, d_out), dtype)
    return (w_in, b_in, w1s, b1s, w2s, b2s, w_out, b_out)


def resnet_reference(x, params, approx_gelu=False):
    """Pure-JAX reference for correctness checking."""
    gelu = _gelu_tanh if approx_gelu else _gelu_exact
    w_in, b_in, w1s, b1s, w2s, b2s, w_out, b_out = params
    h = x.astype(w_in.dtype) @ w_in + b_in
    h = gelu(h)
    for b in range(w1s.shape[0]):
        x0 = h
        t = gelu(h)
        t = t @ w1s[b] + b1s[b]
        t = gelu(t)
        t = t @ w2s[b] + b2s[b]
        h = x0 + t
    return h @ w_out + b_out


if __name__ == "__main__":
    d_in, d_hid, d_out = 4, 32, 8
    batch, seq = 2, 8

    key = jax.random.PRNGKey(0)
    kx, kp = jax.random.split(key)
    x = jax.random.normal(kx, (batch, seq, d_in), jnp.float32)   # [*, C_in]

    # Run A: exact erf GELU (PyTorch nn.GELU default), 2 blocks -> static-unroll path.
    params_a = init_params(kp, d_in, d_hid, d_out, num_blocks=2)
    out_a = jax.block_until_ready(resnet_forward(x, params_a))
    ref_a = resnet_reference(x.reshape(-1, d_in), params_a).reshape(batch, seq, d_out)
    np.testing.assert_allclose(np.asarray(out_a), np.asarray(ref_a), rtol=2e-5, atol=2e-5)
    assert out_a.shape == (batch, seq, d_out)

    # Run B: EUP-routed tanh GELU + lax.fori_loop block path (6 blocks).
    params_b = init_params(kp, d_in, d_hid, d_out, num_blocks=6)
    out_b = jax.block_until_ready(resnet_forward(x, params_b, approx_gelu=True))
    ref_b = resnet_reference(x.reshape(-1, d_in), params_b, approx_gelu=True)
    ref_b = ref_b.reshape(batch, seq, d_out)
    np.testing.assert_allclose(np.asarray(out_b), np.asarray(ref_b), rtol=1e-4, atol=1e-4)

    print("KERNEL_OK")
</pallas_src>

<mosaic_0001>
module attributes {stable_mosaic.version = 11 : i64} {
  func.func @resnet_kernel(%arg0: i32, %arg1: memref<16x128xf32, #tpu.memory_space<vmem>>, %arg2: memref<128x128xf32, #tpu.memory_space<vmem>>, %arg3: memref<1x128xf32, #tpu.memory_space<vmem>>, %arg4: memref<2x128x128xf32, #tpu.memory_space<vmem>>, %arg5: memref<2x1x128xf32, #tpu.memory_space<vmem>>, %arg6: memref<2x128x128xf32, #tpu.memory_space<vmem>>, %arg7: memref<2x1x128xf32, #tpu.memory_space<vmem>>, %arg8: memref<128x128xf32, #tpu.memory_space<vmem>>, %arg9: memref<1x128xf32, #tpu.memory_space<vmem>>, %arg10: memref<16x128xf32, #tpu.memory_space<vmem>>) attributes {dimension_semantics = [#tpu.dimension_semantics<parallel>], iteration_bounds = array<i64: 1>, scalar_prefetch = 0 : i64, scratch_operands = 0 : i64, tpu.core_type = #tpu.core_type<tc>, window_params = [{transform_indices = @transform_0, window_bounds = array<i64: 16, 128>}, {pipeline_mode = #tpu.pipeline_mode<synchronous>, transform_indices = @transform_1, window_bounds = array<i64: 128, 128>}, {pipeline_mode = #tpu.pipeline_mode<synchronous>, transform_indices = @transform_2, window_bounds = array<i64: 1, 128>}, {pipeline_mode = #tpu.pipeline_mode<synchronous>, transform_indices = @transform_3, window_bounds = array<i64: 2, 128, 128>}, {pipeline_mode = #tpu.pipeline_mode<synchronous>, transform_indices = @transform_4, window_bounds = array<i64: 2, 1, 128>}, {pipeline_mode = #tpu.pipeline_mode<synchronous>, transform_indices = @transform_5, window_bounds = array<i64: 2, 128, 128>}, {pipeline_mode = #tpu.pipeline_mode<synchronous>, transform_indices = @transform_6, window_bounds = array<i64: 2, 1, 128>}, {pipeline_mode = #tpu.pipeline_mode<synchronous>, transform_indices = @transform_7, window_bounds = array<i64: 128, 128>}, {pipeline_mode = #tpu.pipeline_mode<synchronous>, transform_indices = @transform_8, window_bounds = array<i64: 1, 128>}, {transform_indices = @transform_9, window_bounds = array<i64: 16, 128>}]} {
    %c0 = arith.constant 0 : index
    %c0_0 = arith.constant 0 : index
    %0 = vector.load %arg1[%c0, %c0_0] : memref<16x128xf32, #tpu.memory_space<vmem>>, vector<16x128xf32>
    %c0_1 = arith.constant 0 : index
    %c0_2 = arith.constant 0 : index
    %1 = vector.load %arg2[%c0_1, %c0_2] : memref<128x128xf32, #tpu.memory_space<vmem>>, vector<128x128xf32>
    %cst = arith.constant dense<0.000000e+00> : vector<16x128xf32>
    %2 = tpu.matmul %0, %1, %cst {dimension_numbers = #tpu.dot_dimension_numbers<[1], [0], [0], [1], [0, 0, 1, 1], [], []>} : vector<16x128xf32>, vector<128x128xf32>, vector<16x128xf32> -> vector<16x128xf32>
    %c0_3 = arith.constant 0 : index
    %c0_4 = arith.constant 0 : index
    %3 = vector.load %arg3[%c0_3, %c0_4] : memref<1x128xf32, #tpu.memory_space<vmem>>, vector<1x128xf32>
    %4 = vector.broadcast %3 : vector<1x128xf32> to vector<16x128xf32>
    %5 = arith.addf %2, %4 : vector<16x128xf32>
    %cst_5 = arith.constant 5.000000e-01 : f32
    %6 = vector.broadcast %cst_5 : f32 to vector<16x128xf32>
    %7 = arith.mulf %6, %5 : vector<16x128xf32>
    %cst_6 = arith.constant 0.707106769 : f32
    %8 = vector.broadcast %cst_6 : f32 to vector<16x128xf32>
    %9 = arith.mulf %5, %8 : vector<16x128xf32>
    %10 = math.erf %9 : vector<16x128xf32>
    %cst_7 = arith.constant 1.000000e+00 : f32
    %11 = vector.broadcast %cst_7 : f32 to vector<16x128xf32>
    %12 = arith.addf %11, %10 : vector<16x128xf32>
    %13 = arith.mulf %7, %12 : vector<16x128xf32>
    %cst_8 = arith.constant 5.000000e-01 : f32
    %14 = vector.broadcast %cst_8 : f32 to vector<16x128xf32>
    %15 = arith.mulf %14, %13 : vector<16x128xf32>
    %cst_9 = arith.constant 0.707106769 : f32
    %16 = vector.broadcast %cst_9 : f32 to vector<16x128xf32>
    %17 = arith.mulf %13, %16 : vector<16x128xf32>
    %18 = math.erf %17 : vector<16x128xf32>
    %cst_10 = arith.constant 1.000000e+00 : f32
    %19 = vector.broadcast %cst_10 : f32 to vector<16x128xf32>
    %20 = arith.addf %19, %18 : vector<16x128xf32>
    %21 = arith.mulf %15, %20 : vector<16x128xf32>
    %c0_11 = arith.constant 0 : index
    %c0_12 = arith.constant 0 : index
    %c0_13 = arith.constant 0 : index
    %22 = vector.load %arg4[%c0_11, %c0_12, %c0_13] : memref<2x128x128xf32, #tpu.memory_space<vmem>>, vector<1x128x128xf32>
    %23 = vector.shape_cast %22 : vector<1x128x128xf32> to vector<128x128xf32>
    %cst_14 = arith.constant dense<0.000000e+00> : vector<16x128xf32>
    %24 = tpu.matmul %21, %23, %cst_14 {dimension_numbers = #tpu.dot_dimension_numbers<[1], [0], [0], [1], [0, 0, 1, 1], [], []>} : vector<16x128xf32>, vector<128x128xf32>, vector<16x128xf32> -> vector<16x128xf32>
    %c0_15 = arith.constant 0 : index
    %c0_16 = arith.constant 0 : index
    %c0_17 = arith.constant 0 : index
    %25 = vector.load %arg5[%c0_15, %c0_16, %c0_17] : memref<2x1x128xf32, #tpu.memory_space<vmem>>, vector<1x1x128xf32>
    %26 = vector.shape_cast %25 : vector<1x1x128xf32> to vector<1x128xf32>
    %27 = vector.broadcast %26 : vector<1x128xf32> to vector<16x128xf32>
    %28 = arith.addf %24, %27 : vector<16x128xf32>
    %cst_18 = arith.constant 5.000000e-01 : f32
    %29 = vector.broadcast %cst_18 : f32 to vector<16x128xf32>
    %30 = arith.mulf %29, %28 : vector<16x128xf32>
    %cst_19 = arith.constant 0.707106769 : f32
    %31 = vector.broadcast %cst_19 : f32 to vector<16x128xf32>
    %32 = arith.mulf %28, %31 : vector<16x128xf32>
    %33 = math.erf %32 : vector<16x128xf32>
    %cst_20 = arith.constant 1.000000e+00 : f32
    %34 = vector.broadcast %cst_20 : f32 to vector<16x128xf32>
    %35 = arith.addf %34, %33 : vector<16x128xf32>
    %36 = arith.mulf %30, %35 : vector<16x128xf32>
    %c0_21 = arith.constant 0 : index
    %c0_22 = arith.constant 0 : index
    %c0_23 = arith.constant 0 : index
    %37 = vector.load %arg6[%c0_21, %c0_22, %c0_23] : memref<2x128x128xf32, #tpu.memory_space<vmem>>, vector<1x128x128xf32>
    %38 = vector.shape_cast %37 : vector<1x128x128xf32> to vector<128x128xf32>
    %cst_24 = arith.constant dense<0.000000e+00> : vector<16x128xf32>
    %39 = tpu.matmul %36, %38, %cst_24 {dimension_numbers = #tpu.dot_dimension_numbers<[1], [0], [0], [1], [0, 0, 1, 1], [], []>} : vector<16x128xf32>, vector<128x128xf32>, vector<16x128xf32> -> vector<16x128xf32>
    %c0_25 = arith.constant 0 : index
    %c0_26 = arith.constant 0 : index
    %c0_27 = arith.constant 0 : index
    %40 = vector.load %arg7[%c0_25, %c0_26, %c0_27] : memref<2x1x128xf32, #tpu.memory_space<vmem>>, vector<1x1x128xf32>
    %41 = vector.shape_cast %40 : vector<1x1x128xf32> to vector<1x128xf32>
    %42 = vector.broadcast %41 : vector<1x128xf32> to vector<16x128xf32>
    %43 = arith.addf %39, %42 : vector<16x128xf32>
    %44 = arith.addf %13, %43 : vector<16x128xf32>
    %cst_28 = arith.constant 5.000000e-01 : f32
    %45 = vector.broadcast %cst_28 : f32 to vector<16x128xf32>
    %46 = arith.mulf %45, %44 : vector<16x128xf32>
    %cst_29 = arith.constant 0.707106769 : f32
    %47 = vector.broadcast %cst_29 : f32 to vector<16x128xf32>
    %48 = arith.mulf %44, %47 : vector<16x128xf32>
    %49 = math.erf %48 : vector<16x128xf32>
    %cst_30 = arith.constant 1.000000e+00 : f32
    %50 = vector.broadcast %cst_30 : f32 to vector<16x128xf32>
    %51 = arith.addf %50, %49 : vector<16x128xf32>
    %52 = arith.mulf %46, %51 : vector<16x128xf32>
    %c1 = arith.constant 1 : index
    %c0_31 = arith.constant 0 : index
    %c0_32 = arith.constant 0 : index
    %53 = vector.load %arg4[%c1, %c0_31, %c0_32] : memref<2x128x128xf32, #tpu.memory_space<vmem>>, vector<1x128x128xf32>
    %54 = vector.shape_cast %53 : vector<1x128x128xf32> to vector<128x128xf32>
    %cst_33 = arith.constant dense<0.000000e+00> : vector<16x128xf32>
    %55 = tpu.matmul %52, %54, %cst_33 {dimension_numbers = #tpu.dot_dimension_numbers<[1], [0], [0], [1], [0, 0, 1, 1], [], []>} : vector<16x128xf32>, vector<128x128xf32>, vector<16x128xf32> -> vector<16x128xf32>
    %c1_34 = arith.constant 1 : index
    %c0_35 = arith.constant 0 : index
    %c0_36 = arith.constant 0 : index
    %56 = vector.load %arg5[%c1_34, %c0_35, %c0_36] : memref<2x1x128xf32, #tpu.memory_space<vmem>>, vector<1x1x128xf32>
    %57 = vector.shape_cast %56 : vector<1x1x128xf32> to vector<1x128xf32>
    %58 = vector.broadcast %57 : vector<1x128xf32> to vector<16x128xf32>
    %59 = arith.addf %55, %58 : vector<16x128xf32>
    %cst_37 = arith.constant 5.000000e-01 : f32
    %60 = vector.broadcast %cst_37 : f32 to vector<16x128xf32>
    %61 = arith.mulf %60, %59 : vector<16x128xf32>
    %cst_38 = arith.constant 0.707106769 : f32
    %62 = vector.broadcast %cst_38 : f32 to vector<16x128xf32>
    %63 = arith.mulf %59, %62 : vector<16x128xf32>
    %64 = math.erf %63 : vector<16x128xf32>
    %cst_39 = arith.constant 1.000000e+00 : f32
    %65 = vector.broadcast %cst_39 : f32 to vector<16x128xf32>
    %66 = arith.addf %65, %64 : vector<16x128xf32>
    %67 = arith.mulf %61, %66 : vector<16x128xf32>
    %c1_40 = arith.constant 1 : index
    %c0_41 = arith.constant 0 : index
    %c0_42 = arith.constant 0 : index
    %68 = vector.load %arg6[%c1_40, %c0_41, %c0_42] : memref<2x128x128xf32, #tpu.memory_space<vmem>>, vector<1x128x128xf32>
    %69 = vector.shape_cast %68 : vector<1x128x128xf32> to vector<128x128xf32>
    %cst_43 = arith.constant dense<0.000000e+00> : vector<16x128xf32>
    %70 = tpu.matmul %67, %69, %cst_43 {dimension_numbers = #tpu.dot_dimension_numbers<[1], [0], [0], [1], [0, 0, 1, 1], [], []>} : vector<16x128xf32>, vector<128x128xf32>, vector<16x128xf32> -> vector<16x128xf32>
    %c1_44 = arith.constant 1 : index
    %c0_45 = arith.constant 0 : index
    %c0_46 = arith.constant 0 : index
    %71 = vector.load %arg7[%c1_44, %c0_45, %c0_46] : memref<2x1x128xf32, #tpu.memory_space<vmem>>, vector<1x1x128xf32>
    %72 = vector.shape_cast %71 : vector<1x1x128xf32> to vector<1x128xf32>
    %73 = vector.broadcast %72 : vector<1x128xf32> to vector<16x128xf32>
    %74 = arith.addf %70, %73 : vector<16x128xf32>
    %75 = arith.addf %44, %74 : vector<16x128xf32>
    %c0_47 = arith.constant 0 : index
    %c0_48 = arith.constant 0 : index
    %76 = vector.load %arg8[%c0_47, %c0_48] : memref<128x128xf32, #tpu.memory_space<vmem>>, vector<128x128xf32>
    %cst_49 = arith.constant dense<0.000000e+00> : vector<16x128xf32>
    %77 = tpu.matmul %75, %76, %cst_49 {dimension_numbers = #tpu.dot_dimension_numbers<[1], [0], [0], [1], [0, 0, 1, 1], [], []>} : vector<16x128xf32>, vector<128x128xf32>, vector<16x128xf32> -> vector<16x128xf32>
    %c0_50 = arith.constant 0 : index
    %c0_51 = arith.constant 0 : index
    %78 = vector.load %arg9[%c0_50, %c0_51] : memref<1x128xf32, #tpu.memory_space<vmem>>, vector<1x128xf32>
    %79 = vector.broadcast %78 : vector<1x128xf32> to vector<16x128xf32>
    %80 = arith.addf %77, %79 : vector<16x128xf32>
    %c0_52 = arith.constant 0 : index
    %c0_53 = arith.constant 0 : index
    %81 = vector.load %arg10[%c0_52, %c0_53] : memref<16x128xf32, #tpu.memory_space<vmem>>, vector<16x128xf32>
    tpu.vector_store %arg10[%c0_52, %c0_53], %80 {strides = array<i32>} : memref<16x128xf32, #tpu.memory_space<vmem>>, vector<16x128xf32>,
    return
  }
  func.func @transform_0(%arg0: i32) -> (i32, i32) {
    %c0_i32 = arith.constant 0 : i32
    %c0_i32_0 = arith.constant 0 : i32
    return %arg0, %c0_i32 : i32, i32
  }
  func.func @transform_1(%arg0: i32) -> (i32, i32) {
    %c0_i32 = arith.constant 0 : i32
    %c0_i32_0 = arith.constant 0 : i32
    %c0_i32_1 = arith.constant 0 : i32
    return %c0_i32, %c0_i32_0 : i32, i32
  }
  func.func @transform_2(%arg0: i32) -> (i32, i32) {
    %c0_i32 = arith.constant 0 : i32
    %c0_i32_0 = arith.constant 0 : i32
    %c0_i32_1 = arith.constant 0 : i32
    return %c0_i32, %c0_i32_0 : i32, i32
  }
  func.func @transform_3(%arg0: i32) -> (i32, i32, i32) {
    %c0_i32 = arith.constant 0 : i32
    %c0_i32_0 = arith.constant 0 : i32
    %c0_i32_1 = arith.constant 0 : i32
    %c0_i32_2 = arith.constant 0 : i32
    return %c0_i32, %c0_i32_0, %c0_i32_1 : i32, i32, i32
  }
  func.func @transform_4(%arg0: i32) -> (i32, i32, i32) {
    %c0_i32 = arith.constant 0 : i32
    %c0_i32_0 = arith.constant 0 : i32
    %c0_i32_1 = arith.constant 0 : i32
    %c0_i32_2 = arith.constant 0 : i32
    return %c0_i32, %c0_i32_0, %c0_i32_1 : i32, i32, i32
  }
  func.func @transform_5(%arg0: i32) -> (i32, i32, i32) {
    %c0_i32 = arith.constant 0 : i32
    %c0_i32_0 = arith.constant 0 : i32
    %c0_i32_1 = arith.constant 0 : i32
    %c0_i32_2 = arith.constant 0 : i32
    return %c0_i32, %c0_i32_0, %c0_i32_1 : i32, i32, i32
  }
  func.func @transform_6(%arg0: i32) -> (i32, i32, i32) {
    %c0_i32 = arith.constant 0 : i32
    %c0_i32_0 = arith.constant 0 : i32
    %c0_i32_1 = arith.constant 0 : i32
    %c0_i32_2 = arith.constant 0 : i32
    return %c0_i32, %c0_i32_0, %c0_i32_1 : i32, i32, i32
  }
  func.func @transform_7(%arg0: i32) -> (i32, i32) {
    %c0_i32 = arith.constant 0 : i32
    %c0_i32_0 = arith.constant 0 : i32
    %c0_i32_1 = arith.constant 0 : i32
    return %c0_i32, %c0_i32_0 : i32, i32
  }
  func.func @transform_8(%arg0: i32) -> (i32, i32) {
    %c0_i32 = arith.constant 0 : i32
    %c0_i32_0 = arith.constant 0 : i32
    %c0_i32_1 = arith.constant 0 : i32
    return %c0_i32, %c0_i32_0 : i32, i32
  }
  func.func @transform_9(%arg0: i32) -> (i32, i32) {
    %c0_i32 = arith.constant 0 : i32
    %c0_i32_0 = arith.constant 0 : i32
    return %arg0, %c0_i32 : i32, i32
  }
}

module attributes {stable_mosaic.version = 11 : i64} {
  func.func @resnet_kernel(%arg0: i32, %arg1: memref<16x128xf32, #tpu.memory_space<vmem>>, %arg2: memref<128x128xf32, #tpu.memory_space<vmem>>, %arg3: memref<1x128xf32, #tpu.memory_space<vmem>>, %arg4: memref<2x128x128xf32, #tpu.memory_space<vmem>>, %arg5: memref<2x1x128xf32, #tpu.memory_space<vmem>>, %arg6: memref<2x128x128xf32, #tpu.memory_space<vmem>>, %arg7: memref<2x1x128xf32, #tpu.memory_space<vmem>>, %arg8: memref<128x128xf32, #tpu.memory_space<vmem>>, %arg9: memref<1x128xf32, #tpu.memory_space<vmem>>, %arg10: memref<16x128xf32, #tpu.memory_space<vmem>>) attributes {dimension_semantics = [#tpu.dimension_semantics<parallel>], iteration_bounds = array<i64: 1>, scalar_prefetch = 0 : i64, scratch_operands = 0 : i64, tpu.core_type = #tpu.core_type<tc>, window_params = [{transform_indices = @transform_0, window_bounds = array<i64: 16, 128>}, {pipeline_mode = #tpu.pipeline_mode<synchronous>, transform_indices = @transform_1, window_bounds = array<i64: 128, 128>}, {pipeline_mode = #tpu.pipeline_mode<synchronous>, transform_indices = @transform_2, window_bounds = array<i64: 1, 128>}, {pipeline_mode = #tpu.pipeline_mode<synchronous>, transform_indices = @transform_3, window_bounds = array<i64: 2, 128, 128>}, {pipeline_mode = #tpu.pipeline_mode<synchronous>, transform_indices = @transform_4, window_bounds = array<i64: 2, 1, 128>}, {pipeline_mode = #tpu.pipeline_mode<synchronous>, transform_indices = @transform_5, window_bounds = array<i64: 2, 128, 128>}, {pipeline_mode = #tpu.pipeline_mode<synchronous>, transform_indices = @transform_6, window_bounds = array<i64: 2, 1, 128>}, {pipeline_mode = #tpu.pipeline_mode<synchronous>, transform_indices = @transform_7, window_bounds = array<i64: 128, 128>}, {pipeline_mode = #tpu.pipeline_mode<synchronous>, transform_indices = @transform_8, window_bounds = array<i64: 1, 128>}, {transform_indices = @transform_9, window_bounds = array<i64: 16, 128>}]} {
    %c0 = arith.constant 0 : index
    %c0_0 = arith.constant 0 : index
    %0 = vector.load %arg1[%c0, %c0_0] : memref<16x128xf32, #tpu.memory_space<vmem>>, vector<16x128xf32>
    %c0_1 = arith.constant 0 : index
    %c0_2 = arith.constant 0 : index
    %1 = vector.load %arg2[%c0_1, %c0_2] : memref<128x128xf32, #tpu.memory_space<vmem>>, vector<128x128xf32>
    %cst = arith.constant dense<0.000000e+00> : vector<16x128xf32>
    %2 = tpu.matmul %0, %1, %cst {dimension_numbers = #tpu.dot_dimension_numbers<[1], [0], [0], [1], [0, 0, 1, 1], [], []>} : vector<16x128xf32>, vector<128x128xf32>, vector<16x128xf32> -> vector<16x128xf32>
    %c0_3 = arith.constant 0 : index
    %c0_4 = arith.constant 0 : index
    %3 = vector.load %arg3[%c0_3, %c0_4] : memref<1x128xf32, #tpu.memory_space<vmem>>, vector<1x128xf32>
    %4 = vector.broadcast %3 : vector<1x128xf32> to vector<16x128xf32>
    %5 = arith.addf %2, %4 : vector<16x128xf32>
    %cst_5 = arith.constant 5.000000e-01 : f32
    %6 = vector.broadcast %cst_5 : f32 to vector<16x128xf32>
    %7 = arith.mulf %6, %5 : vector<16x128xf32>
    %cst_6 = arith.constant 0.707106769 : f32
    %8 = vector.broadcast %cst_6 : f32 to vector<16x128xf32>
    %9 = arith.mulf %5, %8 : vector<16x128xf32>
    %10 = math.erf %9 : vector<16x128xf32>
    %cst_7 = arith.constant 1.000000e+00 : f32
    %11 = vector.broadcast %cst_7 : f32 to vector<16x128xf32>
    %12 = arith.addf %11, %10 : vector<16x128xf32>
    %13 = arith.mulf %7, %12 : vector<16x128xf32>
    %cst_8 = arith.constant 5.000000e-01 : f32
    %14 = vector.broadcast %cst_8 : f32 to vector<16x128xf32>
    %15 = arith.mulf %14, %13 : vector<16x128xf32>
    %cst_9 = arith.constant 0.707106769 : f32
    %16 = vector.broadcast %cst_9 : f32 to vector<16x128xf32>
    %17 = arith.mulf %13, %16 : vector<16x128xf32>
    %18 = math.erf %17 : vector<16x128xf32>
    %cst_10 = arith.constant 1.000000e+00 : f32
    %19 = vector.broadcast %cst_10 : f32 to vector<16x128xf32>
    %20 = arith.addf %19, %18 : vector<16x128xf32>
    %21 = arith.mulf %15, %20 : vector<16x128xf32>
    %c0_11 = arith.constant 0 : index
    %c0_12 = arith.constant 0 : index
    %c0_13 = arith.constant 0 : index
    %22 = vector.load %arg4[%c0_11, %c0_12, %c0_13] : memref<2x128x128xf32, #tpu.memory_space<vmem>>, vector<1x128x128xf32>
    %23 = vector.shape_cast %22 : vector<1x128x128xf32> to vector<128x128xf32>
    %cst_14 = arith.constant dense<0.000000e+00> : vector<16x128xf32>
    %24 = tpu.matmul %21, %23, %cst_14 {dimension_numbers = #tpu.dot_dimension_numbers<[1], [0], [0], [1], [0, 0, 1, 1], [], []>} : vector<16x128xf32>, vector<128x128xf32>, vector<16x128xf32> -> vector<16x128xf32>
    %c0_15 = arith.constant 0 : index
    %c0_16 = arith.constant 0 : index
    %c0_17 = arith.constant 0 : index
    %25 = vector.load %arg5[%c0_15, %c0_16, %c0_17] : memref<2x1x128xf32, #tpu.memory_space<vmem>>, vector<1x1x128xf32>
    %26 = vector.shape_cast %25 : vector<1x1x128xf32> to vector<1x128xf32>
    %27 = vector.broadcast %26 : vector<1x128xf32> to vector<16x128xf32>
    %28 = arith.addf %24, %27 : vector<16x128xf32>
    %cst_18 = arith.constant 5.000000e-01 : f32
    %29 = vector.broadcast %cst_18 : f32 to vector<16x128xf32>
    %30 = arith.mulf %29, %28 : vector<16x128xf32>
    %cst_19 = arith.constant 0.707106769 : f32
    %31 = vector.broadcast %cst_19 : f32 to vector<16x128xf32>
    %32 = arith.mulf %28, %31 : vector<16x128xf32>
    %33 = math.erf %32 : vector<16x128xf32>
    %cst_20 = arith.constant 1.000000e+00 : f32
    %34 = vector.broadcast %cst_20 : f32 to vector<16x128xf32>
    %35 = arith.addf %34, %33 : vector<16x128xf32>
    %36 = arith.mulf %30, %35 : vector<16x128xf32>
    %c0_21 = arith.constant 0 : index
    %c0_22 = arith.constant 0 : index
    %c0_23 = arith.constant 0 : index
    %37 = vector.load %arg6[%c0_21, %c0_22, %c0_23] : memref<2x128x128xf32, #tpu.memory_space<vmem>>, vector<1x128x128xf32>
    %38 = vector.shape_cast %37 : vector<1x128x128xf32> to vector<128x128xf32>
    %cst_24 = arith.constant dense<0.000000e+00> : vector<16x128xf32>
    %39 = tpu.matmul %36, %38, %cst_24 {dimension_numbers = #tpu.dot_dimension_numbers<[1], [0], [0], [1], [0, 0, 1, 1], [], []>} : vector<16x128xf32>, vector<128x128xf32>, vector<16x128xf32> -> vector<16x128xf32>
    %c0_25 = arith.constant 0 : index
    %c0_26 = arith.constant 0 : index
    %c0_27 = arith.constant 0 : index
    %40 = vector.load %arg7[%c0_25, %c0_26, %c0_27] : memref<2x1x128xf32, #tpu.memory_space<vmem>>, vector<1x1x128xf32>
    %41 = vector.shape_cast %40 : vector<1x1x128xf32> to vector<1x128xf32>
    %42 = vector.broadcast %41 : vector<1x128xf32> to vector<16x128xf32>
    %43 = arith.addf %39, %42 : vector<16x128xf32>
    %44 = arith.addf %13, %43 : vector<16x128xf32>
    %cst_28 = arith.constant 5.000000e-01 : f32
    %45 = vector.broadcast %cst_28 : f32 to vector<16x128xf32>
    %46 = arith.mulf %45, %44 : vector<16x128xf32>
    %cst_29 = arith.constant 0.707106769 : f32
    %47 = vector.broadcast %cst_29 : f32 to vector<16x128xf32>
    %48 = arith.mulf %44, %47 : vector<16x128xf32>
    %49 = math.erf %48 : vector<16x128xf32>
    %cst_30 = arith.constant 1.000000e+00 : f32
    %50 = vector.broadcast %cst_30 : f32 to vector<16x128xf32>
    %51 = arith.addf %50, %49 : vector<16x128xf32>
    %52 = arith.mulf %46, %51 : vector<16x128xf32>
    %c1 = arith.constant 1 : index
    %c0_31 = arith.constant 0 : index
    %c0_32 = arith.constant 0 : index
    %53 = vector.load %arg4[%c1, %c0_31, %c0_32] : memref<2x128x128xf32, #tpu.memory_space<vmem>>, vector<1x128x128xf32>
    %54 = vector.shape_cast %53 : vector<1x128x128xf32> to vector<128x128xf32>
    %cst_33 = arith.constant dense<0.000000e+00> : vector<16x128xf32>
    %55 = tpu.matmul %52, %54, %cst_33 {dimension_numbers = #tpu.dot_dimension_numbers<[1], [0], [0], [1], [0, 0, 1, 1], [], []>} : vector<16x128xf32>, vector<128x128xf32>, vector<16x128xf32> -> vector<16x128xf32>
    %c1_34 = arith.constant 1 : index
    %c0_35 = arith.constant 0 : index
    %c0_36 = arith.constant 0 : index
    %56 = vector.load %arg5[%c1_34, %c0_35, %c0_36] : memref<2x1x128xf32, #tpu.memory_space<vmem>>, vector<1x1x128xf32>
    %57 = vector.shape_cast %56 : vector<1x1x128xf32> to vector<1x128xf32>
    %58 = vector.broadcast %57 : vector<1x128xf32> to vector<16x128xf32>
    %59 = arith.addf %55, %58 : vector<16x128xf32>
    %cst_37 = arith.constant 5.000000e-01 : f32
    %60 = vector.broadcast %cst_37 : f32 to vector<16x128xf32>
    %61 = arith.mulf %60, %59 : vector<16x128xf32>
    %cst_38 = arith.constant 0.707106769 : f32
    %62 = vector.broadcast %cst_38 : f32 to vector<16x128xf32>
    %63 = arith.mulf %59, %62 : vector<16x128xf32>
    %64 = math.erf %63 : vector<16x128xf32>
    %cst_39 = arith.constant 1.000000e+00 : f32
    %65 = vector.broadcast %cst_39 : f32 to vector<16x128xf32>
    %66 = arith.addf %65, %64 : vector<16x128xf32>
    %67 = arith.mulf %61, %66 : vector<16x128xf32>
    %c1_40 = arith.constant 1 : index
    %c0_41 = arith.constant 0 : index
    %c0_42 = arith.constant 0 : index
    %68 = vector.load %arg6[%c1_40, %c0_41, %c0_42] : memref<2x128x128xf32, #tpu.memory_space<vmem>>, vector<1x128x128xf32>
    %69 = vector.shape_cast %68 : vector<1x128x128xf32> to vector<128x128xf32>
    %cst_43 = arith.constant dense<0.000000e+00> : vector<16x128xf32>
    %70 = tpu.matmul %67, %69, %cst_43 {dimension_numbers = #tpu.dot_dimension_numbers<[1], [0], [0], [1], [0, 0, 1, 1], [], []>} : vector<16x128xf32>, vector<128x128xf32>, vector<16x128xf32> -> vector<16x128xf32>
    %c1_44 = arith.constant 1 : index
    %c0_45 = arith.constant 0 : index
    %c0_46 = arith.constant 0 : index
    %71 = vector.load %arg7[%c1_44, %c0_45, %c0_46] : memref<2x1x128xf32, #tpu.memory_space<vmem>>, vector<1x1x128xf32>
    %72 = vector.shape_cast %71 : vector<1x1x128xf32> to vector<1x128xf32>
    %73 = vector.broadcast %72 : vector<1x128xf32> to vector<16x128xf32>
    %74 = arith.addf %70, %73 : vector<16x128xf32>
    %75 = arith.addf %44, %74 : vector<16x128xf32>
    %c0_47 = arith.constant 0 : index
    %c0_48 = arith.constant 0 : index
    %76 = vector.load %arg8[%c0_47, %c0_48] : memref<128x128xf32, #tpu.memory_space<vmem>>, vector<128x128xf32>
    %cst_49 = arith.constant dense<0.000000e+00> : vector<16x128xf32>
    %77 = tpu.matmul %75, %76, %cst_49 {dimension_numbers = #tpu.dot_dimension_numbers<[1], [0], [0], [1], [0, 0, 1, 1], [], []>} : vector<16x128xf32>, vector<128x128xf32>, vector<16x128xf32> -> vector<16x128xf32>
    %c0_50 = arith.constant 0 : index
    %c0_51 = arith.constant 0 : index
    %78 = vector.load %arg9[%c0_50, %c0_51] : memref<1x128xf32, #tpu.memory_space<vmem>>, vector<1x128xf32>
    %79 = vector.broadcast %78 : vector<1x128xf32> to vector<16x128xf32>
    %80 = arith.addf %77, %79 : vector<16x128xf32>
    %c0_52 = arith.constant 0 : index
    %c0_53 = arith.constant 0 : index
    %81 = vector.load %arg10[%c0_52, %c0_53] : memref<16x128xf32, #tpu.memory_space<vmem>>, vector<16x128xf32>
    tpu.vector_store %arg10[%c0_52, %c0_53], %80 {strides = array<i32>} : memref<16x128xf32, #tpu.memory_space<vmem>>, vector<16x128xf32>,
    return
  }
  func.func @transform_0(%arg0: i32) -> (i32, i32) {
    %c0_i32 = arith.constant 0 : i32
    %c0_i32_0 = arith.constant 0 : i32
    return %arg0, %c0_i32 : i32, i32
  }
  func.func @transform_1(%arg0: i32) -> (i32, i32) {
    %c0_i32 = arith.constant 0 : i32
    %c0_i32_0 = arith.constant 0 : i32
    %c0_i32_1 = arith.constant 0 : i32
    return %c0_i32, %c0_i32_0 : i32, i32
  }
  func.func @transform_2(%arg0: i32) -> (i32, i32) {
    %c0_i32 = arith.constant 0 : i32
    %c0_i32_0 = arith.constant 0 : i32
    %c0_i32_1 = arith.constant 0 : i32
    return %c0_i32, %c0_i32_0 : i32, i32
  }
  func.func @transform_3(%arg0: i32) -> (i32, i32, i32) {
    %c0_i32 = arith.constant 0 : i32
    %c0_i32_0 = arith.constant 0 : i32
    %c0_i32_1 = arith.constant 0 : i32
    %c0_i32_2 = arith.constant 0 : i32
    return %c0_i32, %c0_i32_0, %c0_i32_1 : i32, i32, i32
  }
  func.func @transform_4(%arg0: i32) -> (i32, i32, i32) {
    %c0_i32 = arith.constant 0 : i32
    %c0_i32_0 = arith.constant 0 : i32
    %c0_i32_1 = arith.constant 0 : i32
    %c0_i32_2 = arith.constant 0 : i32
    return %c0_i32, %c0_i32_0, %c0_i32_1 : i32, i32, i32
  }
  func.func @transform_5(%arg0: i32) -> (i32, i32, i32) {
    %c0_i32 = arith.constant 0 : i32
    %c0_i32_0 = arith.constant 0 : i32
    %c0_i32_1 = arith.constant 0 : i32
    %c0_i32_2 = arith.constant 0 : i32
    return %c0_i32, %c0_i32_0, %c0_i32_1 : i32, i32, i32
  }
  func.func @transform_6(%arg0: i32) -> (i32, i32, i32) {
    %c0_i32 = arith.constant 0 : i32
    %c0_i32_0 = arith.constant 0 : i32
    %c0_i32_1 = arith.constant 0 : i32
    %c0_i32_2 = arith.constant 0 : i32
    return %c0_i32, %c0_i32_0, %c0_i32_1 : i32, i32, i32
  }
  func.func @transform_7(%arg0: i32) -> (i32, i32) {
    %c0_i32 = arith.constant 0 : i32
    %c0_i32_0 = arith.constant 0 : i32
    %c0_i32_1 = arith.constant 0 : i32
    return %c0_i32, %c0_i32_0 : i32, i32
  }
  func.func @transform_8(%arg0: i32) -> (i32, i32) {
    %c0_i32 = arith.constant 0 : i32
    %c0_i32_0 = arith.constant 0 : i32
    %c0_i32_1 = arith.constant 0 : i32
    return %c0_i32, %c0_i32_0 : i32, i32
  }
  func.func @transform_9(%arg0: i32) -> (i32, i32) {
    %c0_i32 = arith.constant 0 : i32
    %c0_i32_0 = arith.constant 0 : i32
    return %arg0, %c0_i32 : i32, i32
  }
}

</mosaic_0001>

<llo_original>
// kernel: tpu_custom_call.1
$region0: #{tpu_custom_call.1}
  #allocation0 [shape = 'u32[]', space=smem, size = 0x4, offset = 0x4, fixed_abs, tag = 'smem constant byte address 0x4 - core index']
  #allocation1 [shape = 'u32[144,128]{1,0:T(1,128)}', space=vmem, size = 0x12000, scoped, tag = 'internal scratch']
  %s0 = inlined_call_operand.hbm [shape: f32[16,128], index: 0, kind: input, shape index: {}]
  %s1 = inlined_call_operand.hbm [shape: f32[128,128], index: 1, kind: input, shape index: {}]
  %s2 = inlined_call_operand.vmem [shape: f32[1,128], index: 2, kind: input, shape index: {}]
  %s3 = inlined_call_operand.hbm [shape: f32[2,128,128], index: 3, kind: input, shape index: {}]
  %s4 = inlined_call_operand.vmem [shape: f32[2,1,128], index: 4, kind: input, shape index: {}]
  %s5 = inlined_call_operand.hbm [shape: f32[2,128,128], index: 5, kind: input, shape index: {}]
  %s6 = inlined_call_operand.vmem [shape: f32[2,1,128], index: 6, kind: input, shape index: {}]
  %s7 = inlined_call_operand.hbm [shape: f32[128,128], index: 7, kind: input, shape index: {}]
  %s8 = inlined_call_operand.vmem [shape: f32[1,128], index: 8, kind: input, shape index: {}]
  %s9 = inlined_call_operand.hbm [shape: f32[16,128], index: 9, kind: output, shape index: {}]
  %s10 = sld [smem:[#allocation0]]
  $region66: #{tpu_custom_call.1} parent=0
    _
  %s12 = ssub.s32 1, %s10
  %s13 = scalar_select 0, %s12, %s10
  $region1: #{tpu_custom_call.1} parent=0
    #allocation2 [shape = 'u8[8192]{0}', space=vmem, size = 0x2000, scoped, tag = 'input window, operand 0, single buffered']
    #allocation3 [shape = 's32[1]{0}', space=sflag, size = 0x4, scoped, tag = 'scoped memory for tpu_custom_call.1']
    #allocation4 [shape = 's32[1]{0}', space=sflag, size = 0x4, scoped, tag = 'scoped memory for tpu_custom_call.1']
    #allocation5 [shape = 'u8[65536]{0}', space=vmem, size = 0x10000, scoped, tag = 'input window, operand 1, single buffered']
    #allocation6 [shape = 's32[1]{0}', space=sflag, size = 0x4, scoped, tag = 'scoped memory for tpu_custom_call.1']
    #allocation7 [shape = 'u8[131072]{0}', space=vmem, size = 0x20000, scoped, tag = 'input window, operand 3, single buffered']
    #allocation8 [shape = 'u8[131072]{0}', space=vmem, size = 0x20000, scoped, tag = 'input window, operand 5, single buffered']
    #allocation9 [shape = 's32[1]{0}', space=sflag, size = 0x4, scoped, tag = 'scoped memory for tpu_custom_call.1']
    #allocation10 [shape = 'u8[65536]{0}', space=vmem, size = 0x10000, scoped, tag = 'input window, operand 7, single buffered']
    #allocation11 [shape = 'u8[8192]{0}', space=vmem, size = 0x2000, scoped, tag = 'output window, operand 0, single buffered']
    %14 = vsyncpa [#allocation3], 0
    %15 = vsyncpa [#allocation6], 0
    %16 = vsyncpa [#allocation9], 0
    %17 = vsyncpa [#allocation4], 0
    // Predicated region
    $region2: #{tpu_custom_call.1} parent=1 // pred_check
      _
    $region3: #{tpu_custom_call.1} parent=1 // pred_check_branch
      %19 = sbr.rel (0) target = $region5
    $region4: #{tpu_custom_call.1} parent=1 // pred_region
      %s21 = ssub.s32 256, 256
      %22 = vsyncadd [#allocation3], %s21
      %s23 = sshll.u32 [#allocation2], 4
      %s24 = int_to_ptr.vmem [resolvable:$true] %s23
      %29 = dma.hbm_to_vmem [thread:$0]  %s0, 256, %s24, [#allocation3], 128, 128, 8
    $region5: #{tpu_custom_call.1} parent=1 // pred_fallthru
      _
    // Predicated region
    $region6: #{tpu_custom_call.1} parent=1 // pred_check
      _
    $region7: #{tpu_custom_call.1} parent=1 // pred_check_branch
      %31 = sbr.rel (0) target = $region9
    $region8: #{tpu_custom_call.1} parent=1 // pred_region
      %s33 = ssub.s32 2048, 2048
      %34 = vsyncadd [#allocation6], %s33
      %s35 = sshll.u32 [#allocation5], 4
      %s36 = int_to_ptr.vmem [resolvable:$true] %s35
      %41 = dma.hbm_to_vmem [thread:$0]  %s1, 2048, %s36, [#allocation6], 128, 128, 8
    $region9: #{tpu_custom_call.1} parent=1 // pred_fallthru
      _
    // Predicated region
    $region10: #{tpu_custom_call.1} parent=1 // pred_check
      _
    $region11: #{tpu_custom_call.1} parent=1 // pred_check_branch
      %43 = sbr.rel (0) target = $region13
    $region12: #{tpu_custom_call.1} parent=1 // pred_region
      _
    $region13: #{tpu_custom_call.1} parent=1 // pred_fallthru
      _
    // Predicated region
    $region14: #{tpu_custom_call.1} parent=1 // pred_check
      _
    $region15: #{tpu_custom_call.1} parent=1 // pred_check_branch
      %45 = sbr.rel (0) target = $region17
    $region16: #{tpu_custom_call.1} parent=1 // pred_region
      %s47 = ssub.s32 4096, 4096
      %48 = vsyncadd [#allocation6], %s47
      %s49 = sshll.u32 [#allocation7], 4
      %s50 = int_to_ptr.vmem [resolvable:$true] %s49
      %55 = dma.hbm_to_vmem [thread:$0]  %s3, 4096, %s50, [#allocation6], 128, 128, 8
    $region17: #{tpu_custom_call.1} parent=1 // pred_fallthru
      _
    // Predicated region
    $region18: #{tpu_custom_call.1} parent=1 // pred_check
      _
    $region19: #{tpu_custom_call.1} parent=1 // pred_check_branch
      %57 = sbr.rel (0) target = $region21
    $region20: #{tpu_custom_call.1} parent=1 // pred_region
      _
    $region21: #{tpu_custom_call.1} parent=1 // pred_fallthru
      _
    // Predicated region
    $region22: #{tpu_custom_call.1} parent=1 // pred_check
      _
    $region23: #{tpu_custom_call.1} parent=1 // pred_check_branch
      %59 = sbr.rel (0) target = $region25
    $region24: #{tpu_custom_call.1} parent=1 // pred_region
      %s61 = ssub.s32 4096, 4096
      %62 = vsyncadd [#allocation9], %s61
      %s63 = sshll.u32 [#allocation8], 4
      %s64 = int_to_ptr.vmem [resolvable:$true] %s63
      %69 = dma.hbm_to_vmem [thread:$0]  %s5, 4096, %s64, [#allocation9], 128, 128, 8
    $region25: #{tpu_custom_call.1} parent=1 // pred_fallthru
      _
    // Predicated region
    $region26: #{tpu_custom_call.1} parent=1 // pred_check
      _
    $region27: #{tpu_custom_call.1} parent=1 // pred_check_branch
      %71 = sbr.rel (0) target = $region29
    $region28: #{tpu_custom_call.1} parent=1 // pred_region
      _
    $region29: #{tpu_custom_call.1} parent=1 // pred_fallthru
      _
    // Predicated region
    $region30: #{tpu_custom_call.1} parent=1 // pred_check
      _
    $region31: #{tpu_custom_call.1} parent=1 // pred_check_branch
      %73 = sbr.rel (0) target = $region33
    $region32: #{tpu_custom_call.1} parent=1 // pred_region
      %s75 = ssub.s32 2048, 2048
      %76 = vsyncadd [#allocation9], %s75
      %s77 = sshll.u32 [#allocation10], 4
      %s78 = int_to_ptr.vmem [resolvable:$true] %s77
      %83 = dma.hbm_to_vmem [thread:$0]  %s7, 2048, %s78, [#allocation9], 128, 128, 8
    $region33: #{tpu_custom_call.1} parent=1 // pred_fallthru
      _
    // Predicated region
    $region34: #{tpu_custom_call.1} parent=1 // pred_check
      _
    $region35: #{tpu_custom_call.1} parent=1 // pred_check_branch
      %85 = sbr.rel (0) target = $region37
    $region36: #{tpu_custom_call.1} parent=1 // pred_region
      _
    $region37: #{tpu_custom_call.1} parent=1 // pred_fallthru
      _
    // Predicated region
    $region38: #{tpu_custom_call.1} parent=1 // pred_check
      _
    $region39: #{tpu_custom_call.1} parent=1 // pred_check_branch
      %87 = sbr.rel (0) target = $region41
    $region40: #{tpu_custom_call.1} parent=1 // pred_region
      %88 = dma.done [#allocation3], 256
    $region41: #{tpu_custom_call.1} parent=1 // pred_fallthru
      _
    // Predicated region
    $region42: #{tpu_custom_call.1} parent=1 // pred_check
      _
    $region43: #{tpu_custom_call.1} parent=1 // pred_check_branch
      %90 = sbr.rel (0) target = $region45
    $region44: #{tpu_custom_call.1} parent=1 // pred_region
      %91 = dma.done [#allocation6], 2048
    $region45: #{tpu_custom_call.1} parent=1 // pred_fallthru
      _
    // Predicated region
    $region46: #{tpu_custom_call.1} parent=1 // pred_check
      _
    $region47: #{tpu_custom_call.1} parent=1 // pred_check_branch
      %93 = sbr.rel (0) target = $region49
    $region48: #{tpu_custom_call.1} parent=1 // pred_region
      %94 = dma.done [#allocation6], 4096
    $region49: #{tpu_custom_call.1} parent=1 // pred_fallthru
      _
    // Predicated region
    $region50: #{tpu_custom_call.1} parent=1 // pred_check
      _
    $region51: #{tpu_custom_call.1} parent=1 // pred_check_branch
      %96 = sbr.rel (0) target = $region53
    $region52: #{tpu_custom_call.1} parent=1 // pred_region
      %97 = dma.done [#allocation9], 4096
    $region53: #{tpu_custom_call.1} parent=1 // pred_fallthru
      _
    // Predicated region
    $region54: #{tpu_custom_call.1} parent=1 // pred_check
      _
    $region55: #{tpu_custom_call.1} parent=1 // pred_check_branch
      %99 = sbr.rel (0) target = $region57
    $region56: #{tpu_custom_call.1} parent=1 // pred_region
      %100 = dma.done [#allocation9], 2048
    $region57: #{tpu_custom_call.1} parent=1 // pred_fallthru
      _
    %v101 = vld [vmem:[#allocation2] sm:$0xff]
    %v102 = vld [vmem:[#allocation2 + $0x8] sm:$0xff]
    %v103 = vld [vmem:[#allocation5] sm:$0xff]
    %v104 = vld [vmem:[#allocation5 + $0x8] sm:$0xff]
    %v105 = vld [vmem:[#allocation5 + $0x10] sm:$0xff]
    %v106 = vld [vmem:[#allocation5 + $0x18] sm:$0xff]
    %v107 = vld [vmem:[#allocation5 + $0x20] sm:$0xff]
    %v108 = vld [vmem:[#allocation5 + $0x28] sm:$0xff]
    %v109 = vld [vmem:[#allocation5 + $0x30] sm:$0xff]
    %v110 = vld [vmem:[#allocation5 + $0x38] sm:$0xff]
    %v111 = vld [vmem:[#allocation5 + $0x40] sm:$0xff]
    %v112 = vld [vmem:[#allocation5 + $0x48] sm:$0xff]
    %v113 = vld [vmem:[#allocation5 + $0x50] sm:$0xff]
    %v114 = vld [vmem:[#allocation5 + $0x58] sm:$0xff]
    %v115 = vld [vmem:[#allocation5 + $0x60] sm:$0xff]
    %v116 = vld [vmem:[#allocation5 + $0x68] sm:$0xff]
    %v117 = vld [vmem:[#allocation5 + $0x70] sm:$0xff]
    %v118 = vld [vmem:[#allocation5 + $0x78] sm:$0xff]
    %v119 = vld [vmem:[%s2] sm:$0x1]
    %v121 = vlaneseq
    %v122 = vshrl.u32 %v121, 7
    %v123 = vsub.s32 0, %v122
    %v124 = vrot.slane %v119, %v123
    %126 = vmatprep.subr.mxu0 0.0
    %127 = vmatpush1.msra.mxu0 %v103
    %128 = vmatprep.subr.mxu0 0.0
    %129 = vmatpush1.msra.mxu0 %v104
    %130 = vmatprep.subr.mxu0 0.0
    %131 = vmatpush1.msra.mxu0 %v105
    %132 = vmatprep.subr.mxu0 0.0
    %133 = vmatpush1.msra.mxu0 %v106
    %134 = vmatprep.subr.mxu0 0.0
    %135 = vmatpush1.msra.mxu0 %v107
    %136 = vmatprep.subr.mxu0 0.0
    %137 = vmatpush1.msra.mxu0 %v108
    %138 = vmatprep.subr.mxu0 0.0
    %139 = vmatpush1.msra.mxu0 %v109
    %140 = vmatprep.subr.mxu0 0.0
    %141 = vmatpush1.msra.mxu0 %v110
    %142 = vmatprep.subr.mxu0 0.0
    %143 = vmatpush1.msra.mxu0 %v111
    %144 = vmatprep.subr.mxu0 0.0
    %145 = vmatpush1.msra.mxu0 %v112
    %146 = vmatprep.subr.mxu0 0.0
    %147 = vmatpush1.msra.mxu0 %v113
    %148 = vmatprep.subr.mxu0 0.0
    %149 = vmatpush1.msra.mxu0 %v114
    %150 = vmatprep.subr.mxu0 0.0
    %151 = vmatpush1.msra.mxu0 %v115
    %152 = vmatprep.subr.mxu0 0.0
    %153 = vmatpush1.msra.mxu0 %v116
    %154 = vmatprep.subr.mxu0 0.0
    %155 = vmatpush1.msra.mxu0 %v117
    %156 = vmatprep.subr.mxu0 0.0
    %157 = vmatpush1.msra.mxu0 %v118
    %158 = vmatprep.subr.mxu0 0.0
    %159 = vmatpush1.msra.mxu0 0.0
    %160 = vmatprep.subr.mxu0 0.0
    %161 = vmatpush1.msra.mxu0 0.0
    %162 = vmatprep.subr.mxu0 0.0
    %163 = vmatpush1.msra.mxu0 0.0
    %164 = vmatprep.subr.mxu0 0.0
    %165 = vmatpush1.msra.mxu0 0.0
    %166 = vmatprep.subr.mxu0 0.0
    %167 = vmatpush1.msra.mxu0 0.0
    %168 = vmatprep.subr.mxu0 0.0
    %169 = vmatpush1.msra.mxu0 0.0
    %170 = vmatprep.subr.mxu0 0.0
    %171 = vmatpush1.msra.mxu0 0.0
    %172 = vmatprep.subr.mxu0 0.0
    %173 = vmatpush1.msra.mxu0 0.0
    %174 = vmatprep.subr.mxu0 0.0
    %175 = vmatpush1.msra.mxu0 0.0
    %176 = vmatprep.subr.mxu0 0.0
    %177 = vmatpush1.msra.mxu0 0.0
    %178 = vmatprep.subr.mxu0 0.0
    %179 = vmatpush1.msra.mxu0 0.0
    %180 = vmatprep.subr.mxu0 0.0
    %181 = vmatpush1.msra.mxu0 0.0
    %182 = vmatprep.subr.mxu0 0.0
    %183 = vmatpush1.msra.mxu0 0.0
    %184 = vmatprep.subr.mxu0 0.0
    %185 = vmatpush1.msra.mxu0 0.0
    %186 = vmatprep.subr.mxu0 0.0
    %187 = vmatpush1.msra.mxu0 0.0
    %188 = vmatprep.subr.mxu0 0.0
    %189 = vmatpush1.msra.mxu0 0.0
    %190 = vmatprep.mubr.f32.mxu0 0.0
    %191 = vmatmul.mubr.f32.gmra.mrb[0].mxu0 %v101
    %v192 = vpop.f32.mrb[0].mxu0
    %v193 = vadd.f32 %v124, %v192
    %v194 = vpop.f32.mrb[0].mxu0
    %195 = vmatprep.mubr.f32.mxu0 0.0
    %196 = vmatmul.mubr.f32.gmra.mrb[0].mxu0 %v102
    %v197 = vpop.f32.mrb[0].mxu0
    %v198 = vadd.f32 %v124, %v197
    %v199 = vpop.f32.mrb[0].mxu0
    %200 = vdwg.mxu0
    %v201 = vmul.f32 %v193, 0.5
    %v202 = vmul.f32 %v198, 0.5
    %v203 = vmul.f32 %v193, 0.70710677
    %v204 = vmul.f32 %v198, 0.70710677
    %v205 = verf.f32.pop %v203
    %v206 = verf.f32.pop %v204
    %v207 = vadd.f32 %v205, 1.0
    %v208 = vadd.f32 %v206, 1.0
    %v209 = vmul.f32 %v201, %v207
    %v210 = vmul.f32 %v202, %v208
    %v211 = vmul.f32 %v209, 0.5
    %v212 = vmul.f32 %v210, 0.5
    %v213 = vmul.f32 %v209, 0.70710677
    %v214 = vmul.f32 %v210, 0.70710677
    %v215 = verf.f32.pop %v213
    %v216 = verf.f32.pop %v214
    %v217 = vadd.f32 %v215, 1.0
    %v218 = vadd.f32 %v216, 1.0
    %v219 = vmul.f32 %v211, %v217
    %v220 = vmul.f32 %v212, %v218
    %v221 = vld [vmem:[#allocation7] sm:$0xff]
    %v222 = vld [vmem:[#allocation7 + $0x8] sm:$0xff]
    %v223 = vld [vmem:[#allocation7 + $0x10] sm:$0xff]
    %v224 = vld [vmem:[#allocation7 + $0x18] sm:$0xff]
    %v225 = vld [vmem:[#allocation7 + $0x20] sm:$0xff]
    %v226 = vld [vmem:[#allocation7 + $0x28] sm:$0xff]
    %v227 = vld [vmem:[#allocation7 + $0x30] sm:$0xff]
    %v228 = vld [vmem:[#allocation7 + $0x38] sm:$0xff]
    %v229 = vld [vmem:[#allocation7 + $0x40] sm:$0xff]
    %v230 = vld [vmem:[#allocation7 + $0x48] sm:$0xff]
    %v231 = vld [vmem:[#allocation7 + $0x50] sm:$0xff]
    %v232 = vld [vmem:[#allocation7 + $0x58] sm:$0xff]
    %v233 = vld [vmem:[#allocation7 + $0x60] sm:$0xff]
    %v234 = vld [vmem:[#allocation7 + $0x68] sm:$0xff]
    %v235 = vld [vmem:[#allocation7 + $0x70] sm:$0xff]
    %v236 = vld [vmem:[#allocation7 + $0x78] sm:$0xff]
    %v237 = vld [vmem:[%s4] sm:$0x1]
    %v239 = vlaneseq
    %v240 = vshrl.u32 %v239, 7
    %v241 = vsub.s32 0, %v240
    %v242 = vrot.slane %v237, %v241
    %244 = vmatprep.subr.mxu0 0.0
    %245 = vmatpush1.msra.mxu0 %v221
    %246 = vmatprep.subr.mxu0 0.0
    %247 = vmatpush1.msra.mxu0 %v222
    %248 = vmatprep.subr.mxu0 0.0
    %249 = vmatpush1.msra.mxu0 %v223
    %250 = vmatprep.subr.mxu0 0.0
    %251 = vmatpush1.msra.mxu0 %v224
    %252 = vmatprep.subr.mxu0 0.0
    %253 = vmatpush1.msra.mxu0 %v225
    %254 = vmatprep.subr.mxu0 0.0
    %255 = vmatpush1.msra.mxu0 %v226
    %256 = vmatprep.subr.mxu0 0.0
    %257 = vmatpush1.msra.mxu0 %v227
    %258 = vmatprep.subr.mxu0 0.0
    %259 = vmatpush1.msra.mxu0 %v228
    %260 = vmatprep.subr.mxu0 0.0
    %261 = vmatpush1.msra.mxu0 %v229
    %262 = vmatprep.subr.mxu0 0.0
    %263 = vmatpush1.msra.mxu0 %v230
    %264 = vmatprep.subr.mxu0 0.0
    %265 = vmatpush1.msra.mxu0 %v231
    %266 = vmatprep.subr.mxu0 0.0
    %267 = vmatpush1.msra.mxu0 %v232
    %268 = vmatprep.subr.mxu0 0.0
    %269 = vmatpush1.msra.mxu0 %v233
    %270 = vmatprep.subr.mxu0 0.0
    %271 = vmatpush1.msra.mxu0 %v234
    %272 = vmatprep.subr.mxu0 0.0
    %273 = vmatpush1.msra.mxu0 %v235
    %274 = vmatprep.subr.mxu0 0.0
    %275 = vmatpush1.msra.mxu0 %v236
    %276 = vmatprep.subr.mxu0 0.0
    %277 = vmatpush1.msra.mxu0 0.0
    %278 = vmatprep.subr.mxu0 0.0
    %279 = vmatpush1.msra.mxu0 0.0
    %280 = vmatprep.subr.mxu0 0.0
    %281 = vmatpush1.msra.mxu0 0.0
    %282 = vmatprep.subr.mxu0 0.0
    %283 = vmatpush1.msra.mxu0 0.0
    %284 = vmatprep.subr.mxu0 0.0
    %285 = vmatpush1.msra.mxu0 0.0
    %286 = vmatprep.subr.mxu0 0.0
    %287 = vmatpush1.msra.mxu0 0.0
    %288 = vmatprep.subr.mxu0 0.0
    %289 = vmatpush1.msra.mxu0 0.0
    %290 = vmatprep.subr.mxu0 0.0
    %291 = vmatpush1.msra.mxu0 0.0
    %292 = vmatprep.subr.mxu0 0.0
    %293 = vmatpush1.msra.mxu0 0.0
    %294 = vmatprep.subr.mxu0 0.0
    %295 = vmatpush1.msra.mxu0 0.0
    %296 = vmatprep.subr.mxu0 0.0
    %297 = vmatpush1.msra.mxu0 0.0
    %298 = vmatprep.subr.mxu0 0.0
    %299 = vmatpush1.msra.mxu0 0.0
    %300 = vmatprep.subr.mxu0 0.0
    %301 = vmatpush1.msra.mxu0 0.0
    %302 = vmatprep.subr.mxu0 0.0
    %303 = vmatpush1.msra.mxu0 0.0
    %304 = vmatprep.subr.mxu0 0.0
    %305 = vmatpush1.msra.mxu0 0.0
    %306 = vmatprep.subr.mxu0 0.0
    %307 = vmatpush1.msra.mxu0 0.0
    %308 = vmatprep.mubr.f32.mxu0 0.0
    %309 = vmatmul.mubr.f32.gmra.mrb[0].mxu0 %v219
    %v310 = vpop.f32.mrb[0].mxu0
    %v311 = vadd.f32 %v242, %v310
    %v312 = vpop.f32.mrb[0].mxu0
    %313 = vmatprep.mubr.f32.mxu0 0.0
    %314 = vmatmul.mubr.f32.gmra.mrb[0].mxu0 %v220
    %v315 = vpop.f32.mrb[0].mxu0
    %v316 = vadd.f32 %v242, %v315
    %v317 = vpop.f32.mrb[0].mxu0
    %318 = vdwg.mxu0
    %v319 = vmul.f32 %v311, 0.5
    %v320 = vmul.f32 %v316, 0.5
    %v321 = vmul.f32 %v311, 0.70710677
    %v322 = vmul.f32 %v316, 0.70710677
    %v323 = verf.f32.pop %v321
    %v324 = verf.f32.pop %v322
    %v325 = vadd.f32 %v323, 1.0
    %v326 = vadd.f32 %v324, 1.0
    %v327 = vmul.f32 %v319, %v325
    %v328 = vmul.f32 %v320, %v326
    %v329 = vld [vmem:[#allocation8] sm:$0xff]
    %v330 = vld [vmem:[#allocation8 + $0x8] sm:$0xff]
    %v331 = vld [vmem:[#allocation8 + $0x10] sm:$0xff]
    %v332 = vld [vmem:[#allocation8 + $0x18] sm:$0xff]
    %v333 = vld [vmem:[#allocation8 + $0x20] sm:$0xff]
    %v334 = vld [vmem:[#allocation8 + $0x28] sm:$0xff]
    %v335 = vld [vmem:[#allocation8 + $0x30] sm:$0xff]
    %v336 = vld [vmem:[#allocation8 + $0x38] sm:$0xff]
    %v337 = vld [vmem:[#allocation8 + $0x40] sm:$0xff]
    %v338 = vld [vmem:[#allocation8 + $0x48] sm:$0xff]
    %v339 = vld [vmem:[#allocation8 + $0x50] sm:$0xff]
    %v340 = vld [vmem:[#allocation8 + $0x58] sm:$0xff]
    %v341 = vld [vmem:[#allocation8 + $0x60] sm:$0xff]
    %v342 = vld [vmem:[#allocation8 + $0x68] sm:$0xff]
    %v343 = vld [vmem:[#allocation8 + $0x70] sm:$0xff]
    %v344 = vld [vmem:[#allocation8 + $0x78] sm:$0xff]
    %v345 = vld [vmem:[%s6] sm:$0x1]
    %v347 = vlaneseq
    %v348 = vshrl.u32 %v347, 7
    %v349 = vsub.s32 0, %v348
    %v350 = vrot.slane %v345, %v349
    %352 = vmatprep.subr.mxu0 0.0
    %353 = vmatpush1.msra.mxu0 %v329
    %354 = vmatprep.subr.mxu0 0.0
    %355 = vmatpush1.msra.mxu0 %v330
    %356 = vmatprep.subr.mxu0 0.0
    %357 = vmatpush1.msra.mxu0 %v331
    %358 = vmatprep.subr.mxu0 0.0
    %359 = vmatpush1.msra.mxu0 %v332
    %360 = vmatprep.subr.mxu0 0.0
    %361 = vmatpush1.msra.mxu0 %v333
    %362 = vmatprep.subr.mxu0 0.0
    %363 = vmatpush1.msra.mxu0 %v334
    %364 = vmatprep.subr.mxu0 0.0
    %365 = vmatpush1.msra.mxu0 %v335
    %366 = vmatprep.subr.mxu0 0.0
    %367 = vmatpush1.msra.mxu0 %v336
    %368 = vmatprep.subr.mxu0 0.0
    %369 = vmatpush1.msra.mxu0 %v337
    %370 = vmatprep.subr.mxu0 0.0
    %371 = vmatpush1.msra.mxu0 %v338
    %372 = vmatprep.subr.mxu0 0.0
    %373 = vmatpush1.msra.mxu0 %v339
    %374 = vmatprep.subr.mxu0 0.0
    %375 = vmatpush1.msra.mxu0 %v340
    %376 = vmatprep.subr.mxu0 0.0
    %377 = vmatpush1.msra.mxu0 %v341
    %378 = vmatprep.subr.mxu0 0.0
    %379 = vmatpush1.msra.mxu0 %v342
    %380 = vmatprep.subr.mxu0 0.0
    %381 = vmatpush1.msra.mxu0 %v343
    %382 = vmatprep.subr.mxu0 0.0
    %383 = vmatpush1.msra.mxu0 %v344
    %384 = vmatprep.subr.mxu0 0.0
    %385 = vmatpush1.msra.mxu0 0.0
    %386 = vmatprep.subr.mxu0 0.0
    %387 = vmatpush1.msra.mxu0 0.0
    %388 = vmatprep.subr.mxu0 0.0
    %389 = vmatpush1.msra.mxu0 0.0
    %390 = vmatprep.subr.mxu0 0.0
    %391 = vmatpush1.msra.mxu0 0.0
    %392 = vmatprep.subr.mxu0 0.0
    %393 = vmatpush1.msra.mxu0 0.0
    %394 = vmatprep.subr.mxu0 0.0
    %395 = vmatpush1.msra.mxu0 0.0
    %396 = vmatprep.subr.mxu0 0.0
    %397 = vmatpush1.msra.mxu0 0.0
    %398 = vmatprep.subr.mxu0 0.0
    %399 = vmatpush1.msra.mxu0 0.0
    %400 = vmatprep.subr.mxu0 0.0
    %401 = vmatpush1.msra.mxu0 0.0
    %402 = vmatprep.subr.mxu0 0.0
    %403 = vmatpush1.msra.mxu0 0.0
    %404 = vmatprep.subr.mxu0 0.0
    %405 = vmatpush1.msra.mxu0 0.0
    %406 = vmatprep.subr.mxu0 0.0
    %407 = vmatpush1.msra.mxu0 0.0
    %408 = vmatprep.subr.mxu0 0.0
    %409 = vmatpush1.msra.mxu0 0.0
    %410 = vmatprep.subr.mxu0 0.0
    %411 = vmatpush1.msra.mxu0 0.0
    %412 = vmatprep.subr.mxu0 0.0
    %413 = vmatpush1.msra.mxu0 0.0
    %414 = vmatprep.subr.mxu0 0.0
    %415 = vmatpush1.msra.mxu0 0.0
    %416 = vmatprep.mubr.f32.mxu0 0.0
    %417 = vmatmul.mubr.f32.gmra.mrb[0].mxu0 %v327
    %v418 = vpop.f32.mrb[0].mxu0
    %v419 = vadd.f32 %v350, %v418
    %v420 = vpop.f32.mrb[0].mxu0
    %421 = vmatprep.mubr.f32.mxu0 0.0
    %422 = vmatmul.mubr.f32.gmra.mrb[0].mxu0 %v328
    %v423 = vpop.f32.mrb[0].mxu0
    %v424 = vadd.f32 %v350, %v423
    %v425 = vpop.f32.mrb[0].mxu0
    %426 = vdwg.mxu0
    %v427 = vadd.f32 %v209, %v419
    %v428 = vadd.f32 %v210, %v424
    %v429 = vmul.f32 %v427, 0.5
    %v430 = vmul.f32 %v428, 0.5
    %v431 = vmul.f32 %v427, 0.70710677
    %v432 = vmul.f32 %v428, 0.70710677
    %v433 = verf.f32.pop %v431
    %v434 = verf.f32.pop %v432
    %v435 = vadd.f32 %v433, 1.0
    %v436 = vadd.f32 %v434, 1.0
    %v437 = vmul.f32 %v429, %v435
    %v438 = vmul.f32 %v430, %v436
    %s439 = scalar_lea.vmem [#allocation7], 128
    %v440 = vld [vmem:[%s439] sm:$0xff]
    %v441 = vld [vmem:[%s439 + $0x8] sm:$0xff]
    %v442 = vld [vmem:[%s439 + $0x10] sm:$0xff]
    %v443 = vld [vmem:[%s439 + $0x18] sm:$0xff]
    %v444 = vld [vmem:[%s439 + $0x20] sm:$0xff]
    %v445 = vld [vmem:[%s439 + $0x28] sm:$0xff]
    %v446 = vld [vmem:[%s439 + $0x30] sm:$0xff]
    %v447 = vld [vmem:[%s439 + $0x38] sm:$0xff]
    %v448 = vld [vmem:[%s439 + $0x40] sm:$0xff]
    %v449 = vld [vmem:[%s439 + $0x48] sm:$0xff]
    %v450 = vld [vmem:[%s439 + $0x50] sm:$0xff]
    %v451 = vld [vmem:[%s439 + $0x58] sm:$0xff]
    %v452 = vld [vmem:[%s439 + $0x60] sm:$0xff]
    %v453 = vld [vmem:[%s439 + $0x68] sm:$0xff]
    %v454 = vld [vmem:[%s439 + $0x70] sm:$0xff]
    %v455 = vld [vmem:[%s439 + $0x78] sm:$0xff]
    %s456 = scalar_lea.vmem %s4, 1
    %v457 = vld [vmem:[%s456] sm:$0x1]
    %v459 = vlaneseq
    %v460 = vshrl.u32 %v459, 7
    %v461 = vsub.s32 0, %v460
    %v462 = vrot.slane %v457, %v461
    %464 = vmatprep.subr.mxu0 0.0
    %465 = vmatpush1.msra.mxu0 %v440
    %466 = vmatprep.subr.mxu0 0.0
    %467 = vmatpush1.msra.mxu0 %v441
    %468 = vmatprep.subr.mxu0 0.0
    %469 = vmatpush1.msra.mxu0 %v442
    %470 = vmatprep.subr.mxu0 0.0
    %471 = vmatpush1.msra.mxu0 %v443
    %472 = vmatprep.subr.mxu0 0.0
    %473 = vmatpush1.msra.mxu0 %v444
    %474 = vmatprep.subr.mxu0 0.0
    %475 = vmatpush1.msra.mxu0 %v445
    %476 = vmatprep.subr.mxu0 0.0
    %477 = vmatpush1.msra.mxu0 %v446
    %478 = vmatprep.subr.mxu0 0.0
    %479 = vmatpush1.msra.mxu0 %v447
    %480 = vmatprep.subr.mxu0 0.0
    %481 = vmatpush1.msra.mxu0 %v448
    %482 = vmatprep.subr.mxu0 0.0
    %483 = vmatpush1.msra.mxu0 %v449
    %484 = vmatprep.subr.mxu0 0.0
    %485 = vmatpush1.msra.mxu0 %v450
    %486 = vmatprep.subr.mxu0 0.0
    %487 = vmatpush1.msra.mxu0 %v451
    %488 = vmatprep.subr.mxu0 0.0
    %489 = vmatpush1.msra.mxu0 %v452
    %490 = vmatprep.subr.mxu0 0.0
    %491 = vmatpush1.msra.mxu0 %v453
    %492 = vmatprep.subr.mxu0 0.0
    %493 = vmatpush1.msra.mxu0 %v454
    %494 = vmatprep.subr.mxu0 0.0
    %495 = vmatpush1.msra.mxu0 %v455
    %496 = vmatprep.subr.mxu0 0.0
    %497 = vmatpush1.msra.mxu0 0.0
    %498 = vmatprep.subr.mxu0 0.0
    %499 = vmatpush1.msra.mxu0 0.0
    %500 = vmatprep.subr.mxu0 0.0
    %501 = vmatpush1.msra.mxu0 0.0
    %502 = vmatprep.subr.mxu0 0.0
    %503 = vmatpush1.msra.mxu0 0.0
    %504 = vmatprep.subr.mxu0 0.0
    %505 = vmatpush1.msra.mxu0 0.0
    %506 = vmatprep.subr.mxu0 0.0
    %507 = vmatpush1.msra.mxu0 0.0
    %508 = vmatprep.subr.mxu0 0.0
    %509 = vmatpush1.msra.mxu0 0.0
    %510 = vmatprep.subr.mxu0 0.0
    %511 = vmatpush1.msra.mxu0 0.0
    %512 = vmatprep.subr.mxu0 0.0
    %513 = vmatpush1.msra.mxu0 0.0
    %514 = vmatprep.subr.mxu0 0.0
    %515 = vmatpush1.msra.mxu0 0.0
    %516 = vmatprep.subr.mxu0 0.0
    %517 = vmatpush1.msra.mxu0 0.0
    %518 = vmatprep.subr.mxu0 0.0
    %519 = vmatpush1.msra.mxu0 0.0
    %520 = vmatprep.subr.mxu0 0.0
    %521 = vmatpush1.msra.mxu0 0.0
    %522 = vmatprep.subr.mxu0 0.0
    %523 = vmatpush1.msra.mxu0 0.0
    %524 = vmatprep.subr.mxu0 0.0
    %525 = vmatpush1.msra.mxu0 0.0
    %526 = vmatprep.subr.mxu0 0.0
    %527 = vmatpush1.msra.mxu0 0.0
    %528 = vmatprep.mubr.f32.mxu0 0.0
    %529 = vmatmul.mubr.f32.gmra.mrb[0].mxu0 %v437
    %v530 = vpop.f32.mrb[0].mxu0
    %v531 = vadd.f32 %v462, %v530
    %v532 = vpop.f32.mrb[0].mxu0
    %533 = vmatprep.mubr.f32.mxu0 0.0
    %534 = vmatmul.mubr.f32.gmra.mrb[0].mxu0 %v438
    %v535 = vpop.f32.mrb[0].mxu0
    %v536 = vadd.f32 %v462, %v535
    %v537 = vpop.f32.mrb[0].mxu0
    %538 = vdwg.mxu0
    %v539 = vmul.f32 %v531, 0.5
    %v540 = vmul.f32 %v536, 0.5
    %v541 = vmul.f32 %v531, 0.70710677
    %v542 = vmul.f32 %v536, 0.70710677
    %v543 = verf.f32.pop %v541
    %v544 = verf.f32.pop %v542
    %v545 = vadd.f32 %v543, 1.0
    %v546 = vadd.f32 %v544, 1.0
    %v547 = vmul.f32 %v539, %v545
    %v548 = vmul.f32 %v540, %v546
    %s549 = scalar_lea.vmem [#allocation8], 128
    %v550 = vld [vmem:[%s549] sm:$0xff]
    %v551 = vld [vmem:[%s549 + $0x8] sm:$0xff]
    %v552 = vld [vmem:[%s549 + $0x10] sm:$0xff]
    %v553 = vld [vmem:[%s549 + $0x18] sm:$0xff]
    %v554 = vld [vmem:[%s549 + $0x20] sm:$0xff]
    %v555 = vld [vmem:[%s549 + $0x28] sm:$0xff]
    %v556 = vld [vmem:[%s549 + $0x30] sm:$0xff]
    %v557 = vld [vmem:[%s549 + $0x38] sm:$0xff]
    %v558 = vld [vmem:[%s549 + $0x40] sm:$0xff]
    %v559 = vld [vmem:[%s549 + $0x48] sm:$0xff]
    %v560 = vld [vmem:[%s549 + $0x50] sm:$0xff]
    %v561 = vld [vmem:[%s549 + $0x58] sm:$0xff]
    %v562 = vld [vmem:[%s549 + $0x60] sm:$0xff]
    %v563 = vld [vmem:[%s549 + $0x68] sm:$0xff]
    %v564 = vld [vmem:[%s549 + $0x70] sm:$0xff]
    %v565 = vld [vmem:[%s549 + $0x78] sm:$0xff]
    %s566 = scalar_lea.vmem %s6, 1
    %v567 = vld [vmem:[%s566] sm:$0x1]
    %v569 = vlaneseq
    %v570 = vshrl.u32 %v569, 7
    %v571 = vsub.s32 0, %v570
    %v572 = vrot.slane %v567, %v571
    %574 = vmatprep.subr.mxu0 0.0
    %575 = vmatpush1.msra.mxu0 %v550
    %576 = vmatprep.subr.mxu0 0.0
    %577 = vmatpush1.msra.mxu0 %v551
    %578 = vmatprep.subr.mxu0 0.0
    %579 = vmatpush1.msra.mxu0 %v552
    %580 = vmatprep.subr.mxu0 0.0
    %581 = vmatpush1.msra.mxu0 %v553
    %582 = vmatprep.subr.mxu0 0.0
    %583 = vmatpush1.msra.mxu0 %v554
    %584 = vmatprep.subr.mxu0 0.0
    %585 = vmatpush1.msra.mxu0 %v555
    %586 = vmatprep.subr.mxu0 0.0
    %587 = vmatpush1.msra.mxu0 %v556
    %588 = vmatprep.subr.mxu0 0.0
    %589 = vmatpush1.msra.mxu0 %v557
    %590 = vmatprep.subr.mxu0 0.0
    %591 = vmatpush1.msra.mxu0 %v558
    %592 = vmatprep.subr.mxu0 0.0
    %593 = vmatpush1.msra.mxu0 %v559
    %594 = vmatprep.subr.mxu0 0.0
    %595 = vmatpush1.msra.mxu0 %v560
    %596 = vmatprep.subr.mxu0 0.0
    %597 = vmatpush1.msra.mxu0 %v561
    %598 = vmatprep.subr.mxu0 0.0
    %599 = vmatpush1.msra.mxu0 %v562
    %600 = vmatprep.subr.mxu0 0.0
    %601 = vmatpush1.msra.mxu0 %v563
    %602 = vmatprep.subr.mxu0 0.0
    %603 = vmatpush1.msra.mxu0 %v564
    %604 = vmatprep.subr.mxu0 0.0
    %605 = vmatpush1.msra.mxu0 %v565
    %606 = vmatprep.subr.mxu0 0.0
    %607 = vmatpush1.msra.mxu0 0.0
    %608 = vmatprep.subr.mxu0 0.0
    %609 = vmatpush1.msra.mxu0 0.0
    %610 = vmatprep.subr.mxu0 0.0
    %611 = vmatpush1.msra.mxu0 0.0
    %612 = vmatprep.subr.mxu0 0.0
    %613 = vmatpush1.msra.mxu0 0.0
    %614 = vmatprep.subr.mxu0 0.0
    %615 = vmatpush1.msra.mxu0 0.0
    %616 = vmatprep.subr.mxu0 0.0
    %617 = vmatpush1.msra.mxu0 0.0
    %618 = vmatprep.subr.mxu0 0.0
    %619 = vmatpush1.msra.mxu0 0.0
    %620 = vmatprep.subr.mxu0 0.0
    %621 = vmatpush1.msra.mxu0 0.0
    %622 = vmatprep.subr.mxu0 0.0
    %623 = vmatpush1.msra.mxu0 0.0
    %624 = vmatprep.subr.mxu0 0.0
    %625 = vmatpush1.msra.mxu0 0.0
    %626 = vmatprep.subr.mxu0 0.0
    %627 = vmatpush1.msra.mxu0 0.0
    %628 = vmatprep.subr.mxu0 0.0
    %629 = vmatpush1.msra.mxu0 0.0
    %630 = vmatprep.subr.mxu0 0.0
    %631 = vmatpush1.msra.mxu0 0.0
    %632 = vmatprep.subr.mxu0 0.0
    %633 = vmatpush1.msra.mxu0 0.0
    %634 = vmatprep.subr.mxu0 0.0
    %635 = vmatpush1.msra.mxu0 0.0
    %636 = vmatprep.subr.mxu0 0.0
    %637 = vmatpush1.msra.mxu0 0.0
    %638 = vmatprep.mubr.f32.mxu0 0.0
    %639 = vmatmul.mubr.f32.gmra.mrb[0].mxu0 %v547
    %v640 = vpop.f32.mrb[0].mxu0
    %v641 = vadd.f32 %v572, %v640
    %v642 = vpop.f32.mrb[0].mxu0
    %643 = vmatprep.mubr.f32.mxu0 0.0
    %644 = vmatmul.mubr.f32.gmra.mrb[0].mxu0 %v548
    %v645 = vpop.f32.mrb[0].mxu0
    %v646 = vadd.f32 %v572, %v645
    %v647 = vpop.f32.mrb[0].mxu0
    %648 = vdwg.mxu0
    %v649 = vadd.f32 %v427, %v641
    %v650 = vadd.f32 %v428, %v646
    %v651 = vld [vmem:[#allocation10] sm:$0xff]
    %v652 = vld [vmem:[#allocation10 + $0x8] sm:$0xff]
    %v653 = vld [vmem:[#allocation10 + $0x10] sm:$0xff]
    %v654 = vld [vmem:[#allocation10 + $0x18] sm:$0xff]
    %v655 = vld [vmem:[#allocation10 + $0x20] sm:$0xff]
    %v656 = vld [vmem:[#allocation10 + $0x28] sm:$0xff]
    %v657 = vld [vmem:[#allocation10 + $0x30] sm:$0xff]
    %v658 = vld [vmem:[#allocation10 + $0x38] sm:$0xff]
    %v659 = vld [vmem:[#allocation10 + $0x40] sm:$0xff]
    %v660 = vld [vmem:[#allocation10 + $0x48] sm:$0xff]
    %v661 = vld [vmem:[#allocation10 + $0x50] sm:$0xff]
    %v662 = vld [vmem:[#allocation10 + $0x58] sm:$0xff]
    %v663 = vld [vmem:[#allocation10 + $0x60] sm:$0xff]
    %v664 = vld [vmem:[#allocation10 + $0x68] sm:$0xff]
    %v665 = vld [vmem:[#allocation10 + $0x70] sm:$0xff]
    %v666 = vld [vmem:[#allocation10 + $0x78] sm:$0xff]
    %v667 = vld [vmem:[%s8] sm:$0x1]
    %v669 = vlaneseq
    %v670 = vshrl.u32 %v669, 7
    %v671 = vsub.s32 0, %v670
    %v672 = vrot.slane %v667, %v671
    %674 = vmatprep.subr.mxu0 0.0
    %675 = vmatpush1.msra.mxu0 %v651
    %676 = vmatprep.subr.mxu0 0.0
    %677 = vmatpush1.msra.mxu0 %v652
    %678 = vmatprep.subr.mxu0 0.0
    %679 = vmatpush1.msra.mxu0 %v653
    %680 = vmatprep.subr.mxu0 0.0
    %681 = vmatpush1.msra.mxu0 %v654
    %682 = vmatprep.subr.mxu0 0.0
    %683 = vmatpush1.msra.mxu0 %v655
    %684 = vmatprep.subr.mxu0 0.0
    %685 = vmatpush1.msra.mxu0 %v656
    %686 = vmatprep.subr.mxu0 0.0
    %687 = vmatpush1.msra.mxu0 %v657
    %688 = vmatprep.subr.mxu0 0.0
    %689 = vmatpush1.msra.mxu0 %v658
    %690 = vmatprep.subr.mxu0 0.0
    %691 = vmatpush1.msra.mxu0 %v659
    %692 = vmatprep.subr.mxu0 0.0
    %693 = vmatpush1.msra.mxu0 %v660
    %694 = vmatprep.subr.mxu0 0.0
    %695 = vmatpush1.msra.mxu0 %v661
    %696 = vmatprep.subr.mxu0 0.0
    %697 = vmatpush1.msra.mxu0 %v662
    %698 = vmatprep.subr.mxu0 0.0
    %699 = vmatpush1.msra.mxu0 %v663
    %700 = vmatprep.subr.mxu0 0.0
    %701 = vmatpush1.msra.mxu0 %v664
    %702 = vmatprep.subr.mxu0 0.0
    %703 = vmatpush1.msra.mxu0 %v665
    %704 = vmatprep.subr.mxu0 0.0
    %705 = vmatpush1.msra.mxu0 %v666
    %706 = vmatprep.subr.mxu0 0.0
    %707 = vmatpush1.msra.mxu0 0.0
    %708 = vmatprep.subr.mxu0 0.0
    %709 = vmatpush1.msra.mxu0 0.0
    %710 = vmatprep.subr.mxu0 0.0
    %711 = vmatpush1.msra.mxu0 0.0
    %712 = vmatprep.subr.mxu0 0.0
    %713 = vmatpush1.msra.mxu0 0.0
    %714 = vmatprep.subr.mxu0 0.0
    %715 = vmatpush1.msra.mxu0 0.0
    %716 = vmatprep.subr.mxu0 0.0
    %717 = vmatpush1.msra.mxu0 0.0
    %718 = vmatprep.subr.mxu0 0.0
    %719 = vmatpush1.msra.mxu0 0.0
    %720 = vmatprep.subr.mxu0 0.0
    %721 = vmatpush1.msra.mxu0 0.0
    %722 = vmatprep.subr.mxu0 0.0
    %723 = vmatpush1.msra.mxu0 0.0
    %724 = vmatprep.subr.mxu0 0.0
    %725 = vmatpush1.msra.mxu0 0.0
    %726 = vmatprep.subr.mxu0 0.0
    %727 = vmatpush1.msra.mxu0 0.0
    %728 = vmatprep.subr.mxu0 0.0
    %729 = vmatpush1.msra.mxu0 0.0
    %730 = vmatprep.subr.mxu0 0.0
    %731 = vmatpush1.msra.mxu0 0.0
    %732 = vmatprep.subr.mxu0 0.0
    %733 = vmatpush1.msra.mxu0 0.0
    %734 = vmatprep.subr.mxu0 0.0
    %735 = vmatpush1.msra.mxu0 0.0
    %736 = vmatprep.subr.mxu0 0.0
    %737 = vmatpush1.msra.mxu0 0.0
    %738 = vmatprep.mubr.f32.mxu0 0.0
    %739 = vmatmul.mubr.f32.gmra.mrb[0].mxu0 %v649
    %v740 = vpop.f32.mrb[0].mxu0
    %v741 = vadd.f32 %v672, %v740
    %v742 = vpop.f32.mrb[0].mxu0
    %743 = vmatprep.mubr.f32.mxu0 0.0
    %744 = vmatmul.mubr.f32.gmra.mrb[0].mxu0 %v650
    %v745 = vpop.f32.mrb[0].mxu0
    %v746 = vadd.f32 %v672, %v745
    %v747 = vpop.f32.mrb[0].mxu0
    %748 = vdwg.mxu0
    %749 = vst [vmem:[#allocation11] sm:$0xff] %v741
    %750 = vst [vmem:[#allocation11 + $0x8] sm:$0xff] %v746
    // Predicated region
    $region58: #{tpu_custom_call.1} parent=1 // pred_check
      _
    $region59: #{tpu_custom_call.1} parent=1 // pred_check_branch
      %752 = sbr.rel (0) target = $region61
    $region60: #{tpu_custom_call.1} parent=1 // pred_region
      %s754 = ssub.s32 256, 256
      %755 = vsyncadd [#allocation4], %s754
      %s756 = sshll.u32 [#allocation11], 4
      %s757 = int_to_ptr.vmem [resolvable:$true] %s756
      %762 = dma.vmem_to_hbm [thread:$0]  %s757, 256, %s9, [#allocation4], 128, 128, 8
    $region61: #{tpu_custom_call.1} parent=1 // pred_fallthru
      _
    // Predicated region
    $region62: #{tpu_custom_call.1} parent=1 // pred_check
      _
    $region63: #{tpu_custom_call.1} parent=1 // pred_check_branch
      %764 = sbr.rel (0) target = $region65
    $region64: #{tpu_custom_call.1} parent=1 // pred_region
      %765 = dma.done [#allocation4], 256
    $region65: #{tpu_custom_call.1} parent=1 // pred_fallthru
      _
    %766 = vsyncpa [#allocation3], 1
    %767 = vsyncpa [#allocation6], 1
    %768 = vsyncpa [#allocation9], 1
    %769 = vsyncpa [#allocation4], 1

// kernel: tpu_custom_call.1
$region0: #{tpu_custom_call.1}
  #allocation0 [shape = 'u32[]', space=smem, size = 0x4, offset = 0x4, fixed_abs, tag = 'smem constant byte address 0x4 - core index']
  #allocation1 [shape = 'u32[144,128]{1,0:T(1,128)}', space=vmem, size = 0x12000, scoped, tag = 'internal scratch']
  %s0 = inlined_call_operand.hbm [shape: f32[16,128], index: 0, kind: input, shape index: {}]
  %s1 = inlined_call_operand.hbm [shape: f32[128,128], index: 1, kind: input, shape index: {}]
  %s2 = inlined_call_operand.vmem [shape: f32[1,128], index: 2, kind: input, shape index: {}]
  %s3 = inlined_call_operand.hbm [shape: f32[2,128,128], index: 3, kind: input, shape index: {}]
  %s4 = inlined_call_operand.vmem [shape: f32[2,1,128], index: 4, kind: input, shape index: {}]
  %s5 = inlined_call_operand.hbm [shape: f32[2,128,128], index: 5, kind: input, shape index: {}]
  %s6 = inlined_call_operand.vmem [shape: f32[2,1,128], index: 6, kind: input, shape index: {}]
  %s7 = inlined_call_operand.hbm [shape: f32[128,128], index: 7, kind: input, shape index: {}]
  %s8 = inlined_call_operand.vmem [shape: f32[1,128], index: 8, kind: input, shape index: {}]
  %s9 = inlined_call_operand.hbm [shape: f32[16,128], index: 9, kind: output, shape index: {}]
  %s10 = sld [smem:[#allocation0]]
  $region66: #{tpu_custom_call.1} parent=0
    _
  %s12 = ssub.s32 1, %s10
  %s13 = scalar_select 0, %s12, %s10
  $region1: #{tpu_custom_call.1} parent=0
    #allocation2 [shape = 'u8[8192]{0}', space=vmem, size = 0x2000, scoped, tag = 'input window, operand 0, single buffered']
    #allocation3 [shape = 's32[1]{0}', space=sflag, size = 0x4, scoped, tag = 'scoped memory for tpu_custom_call.1']
    #allocation4 [shape = 's32[1]{0}', space=sflag, size = 0x4, scoped, tag = 'scoped memory for tpu_custom_call.1']
    #allocation5 [shape = 'u8[65536]{0}', space=vmem, size = 0x10000, scoped, tag = 'input window, operand 1, single buffered']
    #allocation6 [shape = 's32[1]{0}', space=sflag, size = 0x4, scoped, tag = 'scoped memory for tpu_custom_call.1']
    #allocation7 [shape = 'u8[131072]{0}', space=vmem, size = 0x20000, scoped, tag = 'input window, operand 3, single buffered']
    #allocation8 [shape = 'u8[131072]{0}', space=vmem, size = 0x20000, scoped, tag = 'input window, operand 5, single buffered']
    #allocation9 [shape = 's32[1]{0}', space=sflag, size = 0x4, scoped, tag = 'scoped memory for tpu_custom_call.1']
    #allocation10 [shape = 'u8[65536]{0}', space=vmem, size = 0x10000, scoped, tag = 'input window, operand 7, single buffered']
    #allocation11 [shape = 'u8[8192]{0}', space=vmem, size = 0x2000, scoped, tag = 'output window, operand 0, single buffered']
    %14 = vsyncpa [#allocation3], 0
    %15 = vsyncpa [#allocation6], 0
    %16 = vsyncpa [#allocation9], 0
    %17 = vsyncpa [#allocation4], 0
    // Predicated region
    $region2: #{tpu_custom_call.1} parent=1 // pred_check
      _
    $region3: #{tpu_custom_call.1} parent=1 // pred_check_branch
      %19 = sbr.rel (0) target = $region5
    $region4: #{tpu_custom_call.1} parent=1 // pred_region
      %s21 = ssub.s32 256, 256
      %22 = vsyncadd [#allocation3], %s21
      %s23 = sshll.u32 [#allocation2], 4
      %s24 = int_to_ptr.vmem [resolvable:$true] %s23
      %29 = dma.hbm_to_vmem [thread:$0]  %s0, 256, %s24, [#allocation3], 128, 128, 8
    $region5: #{tpu_custom_call.1} parent=1 // pred_fallthru
      _
    // Predicated region
    $region6: #{tpu_custom_call.1} parent=1 // pred_check
      _
    $region7: #{tpu_custom_call.1} parent=1 // pred_check_branch
      %31 = sbr.rel (0) target = $region9
    $region8: #{tpu_custom_call.1} parent=1 // pred_region
      %s33 = ssub.s32 2048, 2048
      %34 = vsyncadd [#allocation6], %s33
      %s35 = sshll.u32 [#allocation5], 4
      %s36 = int_to_ptr.vmem [resolvable:$true] %s35
      %41 = dma.hbm_to_vmem [thread:$0]  %s1, 2048, %s36, [#allocation6], 128, 128, 8
    $region9: #{tpu_custom_call.1} parent=1 // pred_fallthru
      _
    // Predicated region
    $region10: #{tpu_custom_call.1} parent=1 // pred_check
      _
    $region11: #{tpu_custom_call.1} parent=1 // pred_check_branch
      %43 = sbr.rel (0) target = $region13
    $region12: #{tpu_custom_call.1} parent=1 // pred_region
      _
    $region13: #{tpu_custom_call.1} parent=1 // pred_fallthru
      _
    // Predicated region
    $region14: #{tpu_custom_call.1} parent=1 // pred_check
      _
    $region15: #{tpu_custom_call.1} parent=1 // pred_check_branch
      %45 = sbr.rel (0) target = $region17
    $region16: #{tpu_custom_call.1} parent=1 // pred_region
      %s47 = ssub.s32 4096, 4096
      %48 = vsyncadd [#allocation6], %s47
      %s49 = sshll.u32 [#allocation7], 4
      %s50 = int_to_ptr.vmem [resolvable:$true] %s49
      %55 = dma.hbm_to_vmem [thread:$0]  %s3, 4096, %s50, [#allocation6], 128, 128, 8
    $region17: #{tpu_custom_call.1} parent=1 // pred_fallthru
      _
    // Predicated region
    $region18: #{tpu_custom_call.1} parent=1 // pred_check
      _
    $region19: #{tpu_custom_call.1} parent=1 // pred_check_branch
      %57 = sbr.rel (0) target = $region21
    $region20: #{tpu_custom_call.1} parent=1 // pred_region
      _
    $region21: #{tpu_custom_call.1} parent=1 // pred_fallthru
      _
    // Predicated region
    $region22: #{tpu_custom_call.1} parent=1 // pred_check
      _
    $region23: #{tpu_custom_call.1} parent=1 // pred_check_branch
      %59 = sbr.rel (0) target = $region25
    $region24: #{tpu_custom_call.1} parent=1 // pred_region
      %s61 = ssub.s32 4096, 4096
      %62 = vsyncadd [#allocation9], %s61
      %s63 = sshll.u32 [#allocation8], 4
      %s64 = int_to_ptr.vmem [resolvable:$true] %s63
      %69 = dma.hbm_to_vmem [thread:$0]  %s5, 4096, %s64, [#allocation9], 128, 128, 8
    $region25: #{tpu_custom_call.1} parent=1 // pred_fallthru
      _
    // Predicated region
    $region26: #{tpu_custom_call.1} parent=1 // pred_check
      _
    $region27: #{tpu_custom_call.1} parent=1 // pred_check_branch
      %71 = sbr.rel (0) target = $region29
    $region28: #{tpu_custom_call.1} parent=1 // pred_region
      _
    $region29: #{tpu_custom_call.1} parent=1 // pred_fallthru
      _
    // Predicated region
    $region30: #{tpu_custom_call.1} parent=1 // pred_check
      _
    $region31: #{tpu_custom_call.1} parent=1 // pred_check_branch
      %73 = sbr.rel (0) target = $region33
    $region32: #{tpu_custom_call.1} parent=1 // pred_region
      %s75 = ssub.s32 2048, 2048
      %76 = vsyncadd [#allocation9], %s75
      %s77 = sshll.u32 [#allocation10], 4
      %s78 = int_to_ptr.vmem [resolvable:$true] %s77
      %83 = dma.hbm_to_vmem [thread:$0]  %s7, 2048, %s78, [#allocation9], 128, 128, 8
    $region33: #{tpu_custom_call.1} parent=1 // pred_fallthru
      _
    // Predicated region
    $region34: #{tpu_custom_call.1} parent=1 // pred_check
      _
    $region35: #{tpu_custom_call.1} parent=1 // pred_check_branch
      %85 = sbr.rel (0) target = $region37
    $region36: #{tpu_custom_call.1} parent=1 // pred_region
      _
    $region37: #{tpu_custom_call.1} parent=1 // pred_fallthru
      _
    // Predicated region
    $region38: #{tpu_custom_call.1} parent=1 // pred_check
      _
    $region39: #{tpu_custom_call.1} parent=1 // pred_check_branch
      %87 = sbr.rel (0) target = $region41
    $region40: #{tpu_custom_call.1} parent=1 // pred_region
      %88 = dma.done [#allocation3], 256
    $region41: #{tpu_custom_call.1} parent=1 // pred_fallthru
      _
    // Predicated region
    $region42: #{tpu_custom_call.1} parent=1 // pred_check
      _
    $region43: #{tpu_custom_call.1} parent=1 // pred_check_branch
      %90 = sbr.rel (0) target = $region45
    $region44: #{tpu_custom_call.1} parent=1 // pred_region
      %91 = dma.done [#allocation6], 2048
    $region45: #{tpu_custom_call.1} parent=1 // pred_fallthru
      _
    // Predicated region
    $region46: #{tpu_custom_call.1} parent=1 // pred_check
      _
    $region47: #{tpu_custom_call.1} parent=1 // pred_check_branch
      %93 = sbr.rel (0) target = $region49
    $region48: #{tpu_custom_call.1} parent=1 // pred_region
      %94 = dma.done [#allocation6], 4096
    $region49: #{tpu_custom_call.1} parent=1 // pred_fallthru
      _
    // Predicated region
    $region50: #{tpu_custom_call.1} parent=1 // pred_check
      _
    $region51: #{tpu_custom_call.1} parent=1 // pred_check_branch
      %96 = sbr.rel (0) target = $region53
    $region52: #{tpu_custom_call.1} parent=1 // pred_region
      %97 = dma.done [#allocation9], 4096
    $region53: #{tpu_custom_call.1} parent=1 // pred_fallthru
      _
    // Predicated region
    $region54: #{tpu_custom_call.1} parent=1 // pred_check
      _
    $region55: #{tpu_custom_call.1} parent=1 // pred_check_branch
      %99 = sbr.rel (0) target = $region57
    $region56: #{tpu_custom_call.1} parent=1 // pred_region
      %100 = dma.done [#allocation9], 2048
    $region57: #{tpu_custom_call.1} parent=1 // pred_fallthru
      _
    %v101 = vld [vmem:[#allocation2] sm:$0xff]
    %v102 = vld [vmem:[#allocation2 + $0x8] sm:$0xff]
    %v103 = vld [vmem:[#allocation5] sm:$0xff]
    %v104 = vld [vmem:[#allocation5 + $0x8] sm:$0xff]
    %v105 = vld [vmem:[#allocation5 + $0x10] sm:$0xff]
    %v106 = vld [vmem:[#allocation5 + $0x18] sm:$0xff]
    %v107 = vld [vmem:[#allocation5 + $0x20] sm:$0xff]
    %v108 = vld [vmem:[#allocation5 + $0x28] sm:$0xff]
    %v109 = vld [vmem:[#allocation5 + $0x30] sm:$0xff]
    %v110 = vld [vmem:[#allocation5 + $0x38] sm:$0xff]
    %v111 = vld [vmem:[#allocation5 + $0x40] sm:$0xff]
    %v112 = vld [vmem:[#allocation5 + $0x48] sm:$0xff]
    %v113 = vld [vmem:[#allocation5 + $0x50] sm:$0xff]
    %v114 = vld [vmem:[#allocation5 + $0x58] sm:$0xff]
    %v115 = vld [vmem:[#allocation5 + $0x60] sm:$0xff]
    %v116 = vld [vmem:[#allocation5 + $0x68] sm:$0xff]
    %v117 = vld [vmem:[#allocation5 + $0x70] sm:$0xff]
    %v118 = vld [vmem:[#allocation5 + $0x78] sm:$0xff]
    %v119 = vld [vmem:[%s2] sm:$0x1]
    %v121 = vlaneseq
    %v122 = vshrl.u32 %v121, 7
    %v123 = vsub.s32 0, %v122
    %v124 = vrot.slane %v119, %v123
    %126 = vmatprep.subr.mxu0 0.0
    %127 = vmatpush1.msra.mxu0 %v103
    %128 = vmatprep.subr.mxu0 0.0
    %129 = vmatpush1.msra.mxu0 %v104
    %130 = vmatprep.subr.mxu0 0.0
    %131 = vmatpush1.msra.mxu0 %v105
    %132 = vmatprep.subr.mxu0 0.0
    %133 = vmatpush1.msra.mxu0 %v106
    %134 = vmatprep.subr.mxu0 0.0
    %135 = vmatpush1.msra.mxu0 %v107
    %136 = vmatprep.subr.mxu0 0.0
    %137 = vmatpush1.msra.mxu0 %v108
    %138 = vmatprep.subr.mxu0 0.0
    %139 = vmatpush1.msra.mxu0 %v109
    %140 = vmatprep.subr.mxu0 0.0
    %141 = vmatpush1.msra.mxu0 %v110
    %142 = vmatprep.subr.mxu0 0.0
    %143 = vmatpush1.msra.mxu0 %v111
    %144 = vmatprep.subr.mxu0 0.0
    %145 = vmatpush1.msra.mxu0 %v112
    %146 = vmatprep.subr.mxu0 0.0
    %147 = vmatpush1.msra.mxu0 %v113
    %148 = vmatprep.subr.mxu0 0.0
    %149 = vmatpush1.msra.mxu0 %v114
    %150 = vmatprep.subr.mxu0 0.0
    %151 = vmatpush1.msra.mxu0 %v115
    %152 = vmatprep.subr.mxu0 0.0
    %153 = vmatpush1.msra.mxu0 %v116
    %154 = vmatprep.subr.mxu0 0.0
    %155 = vmatpush1.msra.mxu0 %v117
    %156 = vmatprep.subr.mxu0 0.0
    %157 = vmatpush1.msra.mxu0 %v118
    %158 = vmatprep.subr.mxu0 0.0
    %159 = vmatpush1.msra.mxu0 0.0
    %160 = vmatprep.subr.mxu0 0.0
    %161 = vmatpush1.msra.mxu0 0.0
    %162 = vmatprep.subr.mxu0 0.0
    %163 = vmatpush1.msra.mxu0 0.0
    %164 = vmatprep.subr.mxu0 0.0
    %165 = vmatpush1.msra.mxu0 0.0
    %166 = vmatprep.subr.mxu0 0.0
    %167 = vmatpush1.msra.mxu0 0.0
    %168 = vmatprep.subr.mxu0 0.0
    %169 = vmatpush1.msra.mxu0 0.0
    %170 = vmatprep.subr.mxu0 0.0
    %171 = vmatpush1.msra.mxu0 0.0
    %172 = vmatprep.subr.mxu0 0.0
    %173 = vmatpush1.msra.mxu0 0.0
    %174 = vmatprep.subr.mxu0 0.0
    %175 = vmatpush1.msra.mxu0 0.0
    %176 = vmatprep.subr.mxu0 0.0
    %177 = vmatpush1.msra.mxu0 0.0
    %178 = vmatprep.subr.mxu0 0.0
    %179 = vmatpush1.msra.mxu0 0.0
    %180 = vmatprep.subr.mxu0 0.0
    %181 = vmatpush1.msra.mxu0 0.0
    %182 = vmatprep.subr.mxu0 0.0
    %183 = vmatpush1.msra.mxu0 0.0
    %184 = vmatprep.subr.mxu0 0.0
    %185 = vmatpush1.msra.mxu0 0.0
    %186 = vmatprep.subr.mxu0 0.0
    %187 = vmatpush1.msra.mxu0 0.0
    %188 = vmatprep.subr.mxu0 0.0
    %189 = vmatpush1.msra.mxu0 0.0
    %190 = vmatprep.mubr.f32.mxu0 0.0
    %191 = vmatmul.mubr.f32.gmra.mrb[0].mxu0 %v101
    %v192 = vpop.f32.mrb[0].mxu0
    %v193 = vadd.f32 %v124, %v192
    %v194 = vpop.f32.mrb[0].mxu0
    %195 = vmatprep.mubr.f32.mxu0 0.0
    %196 = vmatmul.mubr.f32.gmra.mrb[0].mxu0 %v102
    %v197 = vpop.f32.mrb[0].mxu0
    %v198 = vadd.f32 %v124, %v197
    %v199 = vpop.f32.mrb[0].mxu0
    %200 = vdwg.mxu0
    %v201 = vmul.f32 %v193, 0.5
    %v202 = vmul.f32 %v198, 0.5
    %v203 = vmul.f32 %v193, 0.70710677
    %v204 = vmul.f32 %v198, 0.70710677
    %v205 = verf.f32.pop %v203
    %v206 = verf.f32.pop %v204
    %v207 = vadd.f32 %v205, 1.0
    %v208 = vadd.f32 %v206, 1.0
    %v209 = vmul.f32 %v201, %v207
    %v210 = vmul.f32 %v202, %v208
    %v211 = vmul.f32 %v209, 0.5
    %v212 = vmul.f32 %v210, 0.5
    %v213 = vmul.f32 %v209, 0.70710677
    %v214 = vmul.f32 %v210, 0.70710677
    %v215 = verf.f32.pop %v213
    %v216 = verf.f32.pop %v214
    %v217 = vadd.f32 %v215, 1.0
    %v218 = vadd.f32 %v216, 1.0
    %v219 = vmul.f32 %v211, %v217
    %v220 = vmul.f32 %v212, %v218
    %v221 = vld [vmem:[#allocation7] sm:$0xff]
    %v222 = vld [vmem:[#allocation7 + $0x8] sm:$0xff]
    %v223 = vld [vmem:[#allocation7 + $0x10] sm:$0xff]
    %v224 = vld [vmem:[#allocation7 + $0x18] sm:$0xff]
    %v225 = vld [vmem:[#allocation7 + $0x20] sm:$0xff]
    %v226 = vld [vmem:[#allocation7 + $0x28] sm:$0xff]
    %v227 = vld [vmem:[#allocation7 + $0x30] sm:$0xff]
    %v228 = vld [vmem:[#allocation7 + $0x38] sm:$0xff]
    %v229 = vld [vmem:[#allocation7 + $0x40] sm:$0xff]
    %v230 = vld [vmem:[#allocation7 + $0x48] sm:$0xff]
    %v231 = vld [vmem:[#allocation7 + $0x50] sm:$0xff]
    %v232 = vld [vmem:[#allocation7 + $0x58] sm:$0xff]
    %v233 = vld [vmem:[#allocation7 + $0x60] sm:$0xff]
    %v234 = vld [vmem:[#allocation7 + $0x68] sm:$0xff]
    %v235 = vld [vmem:[#allocation7 + $0x70] sm:$0xff]
    %v236 = vld [vmem:[#allocation7 + $0x78] sm:$0xff]
    %v237 = vld [vmem:[%s4] sm:$0x1]
    %v239 = vlaneseq
    %v240 = vshrl.u32 %v239, 7
    %v241 = vsub.s32 0, %v240
    %v242 = vrot.slane %v237, %v241
    %244 = vmatprep.subr.mxu0 0.0
    %245 = vmatpush1.msra.mxu0 %v221
    %246 = vmatprep.subr.mxu0 0.0
    %247 = vmatpush1.msra.mxu0 %v222
    %248 = vmatprep.subr.mxu0 0.0
    %249 = vmatpush1.msra.mxu0 %v223
    %250 = vmatprep.subr.mxu0 0.0
    %251 = vmatpush1.msra.mxu0 %v224
    %252 = vmatprep.subr.mxu0 0.0
    %253 = vmatpush1.msra.mxu0 %v225
    %254 = vmatprep.subr.mxu0 0.0
    %255 = vmatpush1.msra.mxu0 %v226
    %256 = vmatprep.subr.mxu0 0.0
    %257 = vmatpush1.msra.mxu0 %v227
    %258 = vmatprep.subr.mxu0 0.0
    %259 = vmatpush1.msra.mxu0 %v228
    %260 = vmatprep.subr.mxu0 0.0
    %261 = vmatpush1.msra.mxu0 %v229
    %262 = vmatprep.subr.mxu0 0.0
    %263 = vmatpush1.msra.mxu0 %v230
    %264 = vmatprep.subr.mxu0 0.0
    %265 = vmatpush1.msra.mxu0 %v231
    %266 = vmatprep.subr.mxu0 0.0
    %267 = vmatpush1.msra.mxu0 %v232
    %268 = vmatprep.subr.mxu0 0.0
    %269 = vmatpush1.msra.mxu0 %v233
    %270 = vmatprep.subr.mxu0 0.0
    %271 = vmatpush1.msra.mxu0 %v234
    %272 = vmatprep.subr.mxu0 0.0
    %273 = vmatpush1.msra.mxu0 %v235
    %274 = vmatprep.subr.mxu0 0.0
    %275 = vmatpush1.msra.mxu0 %v236
    %276 = vmatprep.subr.mxu0 0.0
    %277 = vmatpush1.msra.mxu0 0.0
    %278 = vmatprep.subr.mxu0 0.0
    %279 = vmatpush1.msra.mxu0 0.0
    %280 = vmatprep.subr.mxu0 0.0
    %281 = vmatpush1.msra.mxu0 0.0
    %282 = vmatprep.subr.mxu0 0.0
    %283 = vmatpush1.msra.mxu0 0.0
    %284 = vmatprep.subr.mxu0 0.0
    %285 = vmatpush1.msra.mxu0 0.0
    %286 = vmatprep.subr.mxu0 0.0
    %287 = vmatpush1.msra.mxu0 0.0
    %288 = vmatprep.subr.mxu0 0.0
    %289 = vmatpush1.msra.mxu0 0.0
    %290 = vmatprep.subr.mxu0 0.0
    %291 = vmatpush1.msra.mxu0 0.0
    %292 = vmatprep.subr.mxu0 0.0
    %293 = vmatpush1.msra.mxu0 0.0
    %294 = vmatprep.subr.mxu0 0.0
    %295 = vmatpush1.msra.mxu0 0.0
    %296 = vmatprep.subr.mxu0 0.0
    %297 = vmatpush1.msra.mxu0 0.0
    %298 = vmatprep.subr.mxu0 0.0
    %299 = vmatpush1.msra.mxu0 0.0
    %300 = vmatprep.subr.mxu0 0.0
    %301 = vmatpush1.msra.mxu0 0.0
    %302 = vmatprep.subr.mxu0 0.0
    %303 = vmatpush1.msra.mxu0 0.0
    %304 = vmatprep.subr.mxu0 0.0
    %305 = vmatpush1.msra.mxu0 0.0
    %306 = vmatprep.subr.mxu0 0.0
    %307 = vmatpush1.msra.mxu0 0.0
    %308 = vmatprep.mubr.f32.mxu0 0.0
    %309 = vmatmul.mubr.f32.gmra.mrb[0].mxu0 %v219
    %v310 = vpop.f32.mrb[0].mxu0
    %v311 = vadd.f32 %v242, %v310
    %v312 = vpop.f32.mrb[0].mxu0
    %313 = vmatprep.mubr.f32.mxu0 0.0
    %314 = vmatmul.mubr.f32.gmra.mrb[0].mxu0 %v220
    %v315 = vpop.f32.mrb[0].mxu0
    %v316 = vadd.f32 %v242, %v315
    %v317 = vpop.f32.mrb[0].mxu0
    %318 = vdwg.mxu0
    %v319 = vmul.f32 %v311, 0.5
    %v320 = vmul.f32 %v316, 0.5
    %v321 = vmul.f32 %v311, 0.70710677
    %v322 = vmul.f32 %v316, 0.70710677
    %v323 = verf.f32.pop %v321
    %v324 = verf.f32.pop %v322
    %v325 = vadd.f32 %v323, 1.0
    %v326 = vadd.f32 %v324, 1.0
    %v327 = vmul.f32 %v319, %v325
    %v328 = vmul.f32 %v320, %v326
    %v329 = vld [vmem:[#allocation8] sm:$0xff]
    %v330 = vld [vmem:[#allocation8 + $0x8] sm:$0xff]
    %v331 = vld [vmem:[#allocation8 + $0x10] sm:$0xff]
    %v332 = vld [vmem:[#allocation8 + $0x18] sm:$0xff]
    %v333 = vld [vmem:[#allocation8 + $0x20] sm:$0xff]
    %v334 = vld [vmem:[#allocation8 + $0x28] sm:$0xff]
    %v335 = vld [vmem:[#allocation8 + $0x30] sm:$0xff]
    %v336 = vld [vmem:[#allocation8 + $0x38] sm:$0xff]
    %v337 = vld [vmem:[#allocation8 + $0x40] sm:$0xff]
    %v338 = vld [vmem:[#allocation8 + $0x48] sm:$0xff]
    %v339 = vld [vmem:[#allocation8 + $0x50] sm:$0xff]
    %v340 = vld [vmem:[#allocation8 + $0x58] sm:$0xff]
    %v341 = vld [vmem:[#allocation8 + $0x60] sm:$0xff]
    %v342 = vld [vmem:[#allocation8 + $0x68] sm:$0xff]
    %v343 = vld [vmem:[#allocation8 + $0x70] sm:$0xff]
    %v344 = vld [vmem:[#allocation8 + $0x78] sm:$0xff]
    %v345 = vld [vmem:[%s6] sm:$0x1]
    %v347 = vlaneseq
    %v348 = vshrl.u32 %v347, 7
    %v349 = vsub.s32 0, %v348
    %v350 = vrot.slane %v345, %v349
    %352 = vmatprep.subr.mxu0 0.0
    %353 = vmatpush1.msra.mxu0 %v329
    %354 = vmatprep.subr.mxu0 0.0
    %355 = vmatpush1.msra.mxu0 %v330
    %356 = vmatprep.subr.mxu0 0.0
    %357 = vmatpush1.msra.mxu0 %v331
    %358 = vmatprep.subr.mxu0 0.0
    %359 = vmatpush1.msra.mxu0 %v332
    %360 = vmatprep.subr.mxu0 0.0
    %361 = vmatpush1.msra.mxu0 %v333
    %362 = vmatprep.subr.mxu0 0.0
    %363 = vmatpush1.msra.mxu0 %v334
    %364 = vmatprep.subr.mxu0 0.0
    %365 = vmatpush1.msra.mxu0 %v335
    %366 = vmatprep.subr.mxu0 0.0
    %367 = vmatpush1.msra.mxu0 %v336
    %368 = vmatprep.subr.mxu0 0.0
    %369 = vmatpush1.msra.mxu0 %v337
    %370 = vmatprep.subr.mxu0 0.0
    %371 = vmatpush1.msra.mxu0 %v338
    %372 = vmatprep.subr.mxu0 0.0
    %373 = vmatpush1.msra.mxu0 %v339
    %374 = vmatprep.subr.mxu0 0.0
    %375 = vmatpush1.msra.mxu0 %v340
    %376 = vmatprep.subr.mxu0 0.0
    %377 = vmatpush1.msra.mxu0 %v341
    %378 = vmatprep.subr.mxu0 0.0
    %379 = vmatpush1.msra.mxu0 %v342
    %380 = vmatprep.subr.mxu0 0.0
    %381 = vmatpush1.msra.mxu0 %v343
    %382 = vmatprep.subr.mxu0 0.0
    %383 = vmatpush1.msra.mxu0 %v344
    %384 = vmatprep.subr.mxu0 0.0
    %385 = vmatpush1.msra.mxu0 0.0
    %386 = vmatprep.subr.mxu0 0.0
    %387 = vmatpush1.msra.mxu0 0.0
    %388 = vmatprep.subr.mxu0 0.0
    %389 = vmatpush1.msra.mxu0 0.0
    %390 = vmatprep.subr.mxu0 0.0
    %391 = vmatpush1.msra.mxu0 0.0
    %392 = vmatprep.subr.mxu0 0.0
    %393 = vmatpush1.msra.mxu0 0.0
    %394 = vmatprep.subr.mxu0 0.0
    %395 = vmatpush1.msra.mxu0 0.0
    %396 = vmatprep.subr.mxu0 0.0
    %397 = vmatpush1.msra.mxu0 0.0
    %398 = vmatprep.subr.mxu0 0.0
    %399 = vmatpush1.msra.mxu0 0.0
    %400 = vmatprep.subr.mxu0 0.0
    %401 = vmatpush1.msra.mxu0 0.0
    %402 = vmatprep.subr.mxu0 0.0
    %403 = vmatpush1.msra.mxu0 0.0
    %404 = vmatprep.subr.mxu0 0.0
    %405 = vmatpush1.msra.mxu0 0.0
    %406 = vmatprep.subr.mxu0 0.0
    %407 = vmatpush1.msra.mxu0 0.0
    %408 = vmatprep.subr.mxu0 0.0
    %409 = vmatpush1.msra.mxu0 0.0
    %410 = vmatprep.subr.mxu0 0.0
    %411 = vmatpush1.msra.mxu0 0.0
    %412 = vmatprep.subr.mxu0 0.0
    %413 = vmatpush1.msra.mxu0 0.0
    %414 = vmatprep.subr.mxu0 0.0
    %415 = vmatpush1.msra.mxu0 0.0
    %416 = vmatprep.mubr.f32.mxu0 0.0
    %417 = vmatmul.mubr.f32.gmra.mrb[0].mxu0 %v327
    %v418 = vpop.f32.mrb[0].mxu0
    %v419 = vadd.f32 %v350, %v418
    %v420 = vpop.f32.mrb[0].mxu0
    %421 = vmatprep.mubr.f32.mxu0 0.0
    %422 = vmatmul.mubr.f32.gmra.mrb[0].mxu0 %v328
    %v423 = vpop.f32.mrb[0].mxu0
    %v424 = vadd.f32 %v350, %v423
    %v425 = vpop.f32.mrb[0].mxu0
    %426 = vdwg.mxu0
    %v427 = vadd.f32 %v209, %v419
    %v428 = vadd.f32 %v210, %v424
    %v429 = vmul.f32 %v427, 0.5
    %v430 = vmul.f32 %v428, 0.5
    %v431 = vmul.f32 %v427, 0.70710677
    %v432 = vmul.f32 %v428, 0.70710677
    %v433 = verf.f32.pop %v431
    %v434 = verf.f32.pop %v432
    %v435 = vadd.f32 %v433, 1.0
    %v436 = vadd.f32 %v434, 1.0
    %v437 = vmul.f32 %v429, %v435
    %v438 = vmul.f32 %v430, %v436
    %s439 = scalar_lea.vmem [#allocation7], 128
    %v440 = vld [vmem:[%s439] sm:$0xff]
    %v441 = vld [vmem:[%s439 + $0x8] sm:$0xff]
    %v442 = vld [vmem:[%s439 + $0x10] sm:$0xff]
    %v443 = vld [vmem:[%s439 + $0x18] sm:$0xff]
    %v444 = vld [vmem:[%s439 + $0x20] sm:$0xff]
    %v445 = vld [vmem:[%s439 + $0x28] sm:$0xff]
    %v446 = vld [vmem:[%s439 + $0x30] sm:$0xff]
    %v447 = vld [vmem:[%s439 + $0x38] sm:$0xff]
    %v448 = vld [vmem:[%s439 + $0x40] sm:$0xff]
    %v449 = vld [vmem:[%s439 + $0x48] sm:$0xff]
    %v450 = vld [vmem:[%s439 + $0x50] sm:$0xff]
    %v451 = vld [vmem:[%s439 + $0x58] sm:$0xff]
    %v452 = vld [vmem:[%s439 + $0x60] sm:$0xff]
    %v453 = vld [vmem:[%s439 + $0x68] sm:$0xff]
    %v454 = vld [vmem:[%s439 + $0x70] sm:$0xff]
    %v455 = vld [vmem:[%s439 + $0x78] sm:$0xff]
    %s456 = scalar_lea.vmem %s4, 1
    %v457 = vld [vmem:[%s456] sm:$0x1]
    %v459 = vlaneseq
    %v460 = vshrl.u32 %v459, 7
    %v461 = vsub.s32 0, %v460
    %v462 = vrot.slane %v457, %v461
    %464 = vmatprep.subr.mxu0 0.0
    %465 = vmatpush1.msra.mxu0 %v440
    %466 = vmatprep.subr.mxu0 0.0
    %467 = vmatpush1.msra.mxu0 %v441
    %468 = vmatprep.subr.mxu0 0.0
    %469 = vmatpush1.msra.mxu0 %v442
    %470 = vmatprep.subr.mxu0 0.0
    %471 = vmatpush1.msra.mxu0 %v443
    %472 = vmatprep.subr.mxu0 0.0
    %473 = vmatpush1.msra.mxu0 %v444
    %474 = vmatprep.subr.mxu0 0.0
    %475 = vmatpush1.msra.mxu0 %v445
    %476 = vmatprep.subr.mxu0 0.0
    %477 = vmatpush1.msra.mxu0 %v446
    %478 = vmatprep.subr.mxu0 0.0
    %479 = vmatpush1.msra.mxu0 %v447
    %480 = vmatprep.subr.mxu0 0.0
    %481 = vmatpush1.msra.mxu0 %v448
    %482 = vmatprep.subr.mxu0 0.0
    %483 = vmatpush1.msra.mxu0 %v449
    %484 = vmatprep.subr.mxu0 0.0
    %485 = vmatpush1.msra.mxu0 %v450
    %486 = vmatprep.subr.mxu0 0.0
    %487 = vmatpush1.msra.mxu0 %v451
    %488 = vmatprep.subr.mxu0 0.0
    %489 = vmatpush1.msra.mxu0 %v452
    %490 = vmatprep.subr.mxu0 0.0
    %491 = vmatpush1.msra.mxu0 %v453
    %492 = vmatprep.subr.mxu0 0.0
    %493 = vmatpush1.msra.mxu0 %v454
    %494 = vmatprep.subr.mxu0 0.0
    %495 = vmatpush1.msra.mxu0 %v455
    %496 = vmatprep.subr.mxu0 0.0
    %497 = vmatpush1.msra.mxu0 0.0
    %498 = vmatprep.subr.mxu0 0.0
    %499 = vmatpush1.msra.mxu0 0.0
    %500 = vmatprep.subr.mxu0 0.0
    %501 = vmatpush1.msra.mxu0 0.0
    %502 = vmatprep.subr.mxu0 0.0
    %503 = vmatpush1.msra.mxu0 0.0
    %504 = vmatprep.subr.mxu0 0.0
    %505 = vmatpush1.msra.mxu0 0.0
    %506 = vmatprep.subr.mxu0 0.0
    %507 = vmatpush1.msra.mxu0 0.0
    %508 = vmatprep.subr.mxu0 0.0
    %509 = vmatpush1.msra.mxu0 0.0
    %510 = vmatprep.subr.mxu0 0.0
    %511 = vmatpush1.msra.mxu0 0.0
    %512 = vmatprep.subr.mxu0 0.0
    %513 = vmatpush1.msra.mxu0 0.0
    %514 = vmatprep.subr.mxu0 0.0
    %515 = vmatpush1.msra.mxu0 0.0
    %516 = vmatprep.subr.mxu0 0.0
    %517 = vmatpush1.msra.mxu0 0.0
    %518 = vmatprep.subr.mxu0 0.0
    %519 = vmatpush1.msra.mxu0 0.0
    %520 = vmatprep.subr.mxu0 0.0
    %521 = vmatpush1.msra.mxu0 0.0
    %522 = vmatprep.subr.mxu0 0.0
    %523 = vmatpush1.msra.mxu0 0.0
    %524 = vmatprep.subr.mxu0 0.0
    %525 = vmatpush1.msra.mxu0 0.0
    %526 = vmatprep.subr.mxu0 0.0
    %527 = vmatpush1.msra.mxu0 0.0
    %528 = vmatprep.mubr.f32.mxu0 0.0
    %529 = vmatmul.mubr.f32.gmra.mrb[0].mxu0 %v437
    %v530 = vpop.f32.mrb[0].mxu0
    %v531 = vadd.f32 %v462, %v530
    %v532 = vpop.f32.mrb[0].mxu0
    %533 = vmatprep.mubr.f32.mxu0 0.0
    %534 = vmatmul.mubr.f32.gmra.mrb[0].mxu0 %v438
    %v535 = vpop.f32.mrb[0].mxu0
    %v536 = vadd.f32 %v462, %v535
    %v537 = vpop.f32.mrb[0].mxu0
    %538 = vdwg.mxu0
    %v539 = vmul.f32 %v531, 0.5
    %v540 = vmul.f32 %v536, 0.5
    %v541 = vmul.f32 %v531, 0.70710677
    %v542 = vmul.f32 %v536, 0.70710677
    %v543 = verf.f32.pop %v541
    %v544 = verf.f32.pop %v542
    %v545 = vadd.f32 %v543, 1.0
    %v546 = vadd.f32 %v544, 1.0
    %v547 = vmul.f32 %v539, %v545
    %v548 = vmul.f32 %v540, %v546
    %s549 = scalar_lea.vmem [#allocation8], 128
    %v550 = vld [vmem:[%s549] sm:$0xff]
    %v551 = vld [vmem:[%s549 + $0x8] sm:$0xff]
    %v552 = vld [vmem:[%s549 + $0x10] sm:$0xff]
    %v553 = vld [vmem:[%s549 + $0x18] sm:$0xff]
    %v554 = vld [vmem:[%s549 + $0x20] sm:$0xff]
    %v555 = vld [vmem:[%s549 + $0x28] sm:$0xff]
    %v556 = vld [vmem:[%s549 + $0x30] sm:$0xff]
    %v557 = vld [vmem:[%s549 + $0x38] sm:$0xff]
    %v558 = vld [vmem:[%s549 + $0x40] sm:$0xff]
    %v559 = vld [vmem:[%s549 + $0x48] sm:$0xff]
    %v560 = vld [vmem:[%s549 + $0x50] sm:$0xff]
    %v561 = vld [vmem:[%s549 + $0x58] sm:$0xff]
    %v562 = vld [vmem:[%s549 + $0x60] sm:$0xff]
    %v563 = vld [vmem:[%s549 + $0x68] sm:$0xff]
    %v564 = vld [vmem:[%s549 + $0x70] sm:$0xff]
    %v565 = vld [vmem:[%s549 + $0x78] sm:$0xff]
    %s566 = scalar_lea.vmem %s6, 1
    %v567 = vld [vmem:[%s566] sm:$0x1]
    %v569 = vlaneseq
    %v570 = vshrl.u32 %v569, 7
    %v571 = vsub.s32 0, %v570
    %v572 = vrot.slane %v567, %v571
    %574 = vmatprep.subr.mxu0 0.0
    %575 = vmatpush1.msra.mxu0 %v550
    %576 = vmatprep.subr.mxu0 0.0
    %577 = vmatpush1.msra.mxu0 %v551
    %578 = vmatprep.subr.mxu0 0.0
    %579 = vmatpush1.msra.mxu0 %v552
    %580 = vmatprep.subr.mxu0 0.0
    %581 = vmatpush1.msra.mxu0 %v553
    %582 = vmatprep.subr.mxu0 0.0
    %583 = vmatpush1.msra.mxu0 %v554
    %584 = vmatprep.subr.mxu0 0.0
    %585 = vmatpush1.msra.mxu0 %v555
    %586 = vmatprep.subr.mxu0 0.0
    %587 = vmatpush1.msra.mxu0 %v556
    %588 = vmatprep.subr.mxu0 0.0
    %589 = vmatpush1.msra.mxu0 %v557
    %590 = vmatprep.subr.mxu0 0.0
    %591 = vmatpush1.msra.mxu0 %v558
    %592 = vmatprep.subr.mxu0 0.0
    %593 = vmatpush1.msra.mxu0 %v559
    %594 = vmatprep.subr.mxu0 0.0
    %595 = vmatpush1.msra.mxu0 %v560
    %596 = vmatprep.subr.mxu0 0.0
    %597 = vmatpush1.msra.mxu0 %v561
    %598 = vmatprep.subr.mxu0 0.0
    %599 = vmatpush1.msra.mxu0 %v562
    %600 = vmatprep.subr.mxu0 0.0
    %601 = vmatpush1.msra.mxu0 %v563
    %602 = vmatprep.subr.mxu0 0.0
    %603 = vmatpush1.msra.mxu0 %v564
    %604 = vmatprep.subr.mxu0 0.0
    %605 = vmatpush1.msra.mxu0 %v565
    %606 = vmatprep.subr.mxu0 0.0
    %607 = vmatpush1.msra.mxu0 0.0
    %608 = vmatprep.subr.mxu0 0.0
    %609 = vmatpush1.msra.mxu0 0.0
    %610 = vmatprep.subr.mxu0 0.0
    %611 = vmatpush1.msra.mxu0 0.0
    %612 = vmatprep.subr.mxu0 0.0
    %613 = vmatpush1.msra.mxu0 0.0
    %614 = vmatprep.subr.mxu0 0.0
    %615 = vmatpush1.msra.mxu0 0.0
    %616 = vmatprep.subr.mxu0 0.0
    %617 = vmatpush1.msra.mxu0 0.0
    %618 = vmatprep.subr.mxu0 0.0
    %619 = vmatpush1.msra.mxu0 0.0
    %620 = vmatprep.subr.mxu0 0.0
    %621 = vmatpush1.msra.mxu0 0.0
    %622 = vmatprep.subr.mxu0 0.0
    %623 = vmatpush1.msra.mxu0 0.0
    %624 = vmatprep.subr.mxu0 0.0
    %625 = vmatpush1.msra.mxu0 0.0
    %626 = vmatprep.subr.mxu0 0.0
    %627 = vmatpush1.msra.mxu0 0.0
    %628 = vmatprep.subr.mxu0 0.0
    %629 = vmatpush1.msra.mxu0 0.0
    %630 = vmatprep.subr.mxu0 0.0
    %631 = vmatpush1.msra.mxu0 0.0
    %632 = vmatprep.subr.mxu0 0.0
    %633 = vmatpush1.msra.mxu0 0.0
    %634 = vmatprep.subr.mxu0 0.0
    %635 = vmatpush1.msra.mxu0 0.0
    %636 = vmatprep.subr.mxu0 0.0
    %637 = vmatpush1.msra.mxu0 0.0
    %638 = vmatprep.mubr.f32.mxu0 0.0
    %639 = vmatmul.mubr.f32.gmra.mrb[0].mxu0 %v547
    %v640 = vpop.f32.mrb[0].mxu0
    %v641 = vadd.f32 %v572, %v640
    %v642 = vpop.f32.mrb[0].mxu0
    %643 = vmatprep.mubr.f32.mxu0 0.0
    %644 = vmatmul.mubr.f32.gmra.mrb[0].mxu0 %v548
    %v645 = vpop.f32.mrb[0].mxu0
    %v646 = vadd.f32 %v572, %v645
    %v647 = vpop.f32.mrb[0].mxu0
    %648 = vdwg.mxu0
    %v649 = vadd.f32 %v427, %v641
    %v650 = vadd.f32 %v428, %v646
    %v651 = vld [vmem:[#allocation10] sm:$0xff]
    %v652 = vld [vmem:[#allocation10 + $0x8] sm:$0xff]
    %v653 = vld [vmem:[#allocation10 + $0x10] sm:$0xff]
    %v654 = vld [vmem:[#allocation10 + $0x18] sm:$0xff]
    %v655 = vld [vmem:[#allocation10 + $0x20] sm:$0xff]
    %v656 = vld [vmem:[#allocation10 + $0x28] sm:$0xff]
    %v657 = vld [vmem:[#allocation10 + $0x30] sm:$0xff]
    %v658 = vld [vmem:[#allocation10 + $0x38] sm:$0xff]
    %v659 = vld [vmem:[#allocation10 + $0x40] sm:$0xff]
    %v660 = vld [vmem:[#allocation10 + $0x48] sm:$0xff]
    %v661 = vld [vmem:[#allocation10 + $0x50] sm:$0xff]
    %v662 = vld [vmem:[#allocation10 + $0x58] sm:$0xff]
    %v663 = vld [vmem:[#allocation10 + $0x60] sm:$0xff]
    %v664 = vld [vmem:[#allocation10 + $0x68] sm:$0xff]
    %v665 = vld [vmem:[#allocation10 + $0x70] sm:$0xff]
    %v666 = vld [vmem:[#allocation10 + $0x78] sm:$0xff]
    %v667 = vld [vmem:[%s8] sm:$0x1]
    %v669 = vlaneseq
    %v670 = vshrl.u32 %v669, 7
    %v671 = vsub.s32 0, %v670
    %v672 = vrot.slane %v667, %v671
    %674 = vmatprep.subr.mxu0 0.0
    %675 = vmatpush1.msra.mxu0 %v651
    %676 = vmatprep.subr.mxu0 0.0
    %677 = vmatpush1.msra.mxu0 %v652
    %678 = vmatprep.subr.mxu0 0.0
    %679 = vmatpush1.msra.mxu0 %v653
    %680 = vmatprep.subr.mxu0 0.0
    %681 = vmatpush1.msra.mxu0 %v654
    %682 = vmatprep.subr.mxu0 0.0
    %683 = vmatpush1.msra.mxu0 %v655
    %684 = vmatprep.subr.mxu0 0.0
    %685 = vmatpush1.msra.mxu0 %v656
    %686 = vmatprep.subr.mxu0 0.0
    %687 = vmatpush1.msra.mxu0 %v657
    %688 = vmatprep.subr.mxu0 0.0
    %689 = vmatpush1.msra.mxu0 %v658
    %690 = vmatprep.subr.mxu0 0.0
    %691 = vmatpush1.msra.mxu0 %v659
    %692 = vmatprep.subr.mxu0 0.0
    %693 = vmatpush1.msra.mxu0 %v660
    %694 = vmatprep.subr.mxu0 0.0
    %695 = vmatpush1.msra.mxu0 %v661
    %696 = vmatprep.subr.mxu0 0.0
    %697 = vmatpush1.msra.mxu0 %v662
    %698 = vmatprep.subr.mxu0 0.0
    %699 = vmatpush1.msra.mxu0 %v663
    %700 = vmatprep.subr.mxu0 0.0
    %701 = vmatpush1.msra.mxu0 %v664
    %702 = vmatprep.subr.mxu0 0.0
    %703 = vmatpush1.msra.mxu0 %v665
    %704 = vmatprep.subr.mxu0 0.0
    %705 = vmatpush1.msra.mxu0 %v666
    %706 = vmatprep.subr.mxu0 0.0
    %707 = vmatpush1.msra.mxu0 0.0
    %708 = vmatprep.subr.mxu0 0.0
    %709 = vmatpush1.msra.mxu0 0.0
    %710 = vmatprep.subr.mxu0 0.0
    %711 = vmatpush1.msra.mxu0 0.0
    %712 = vmatprep.subr.mxu0 0.0
    %713 = vmatpush1.msra.mxu0 0.0
    %714 = vmatprep.subr.mxu0 0.0
    %715 = vmatpush1.msra.mxu0 0.0
    %716 = vmatprep.subr.mxu0 0.0
    %717 = vmatpush1.msra.mxu0 0.0
    %718 = vmatprep.subr.mxu0 0.0
    %719 = vmatpush1.msra.mxu0 0.0
    %720 = vmatprep.subr.mxu0 0.0
    %721 = vmatpush1.msra.mxu0 0.0
    %722 = vmatprep.subr.mxu0 0.0
    %723 = vmatpush1.msra.mxu0 0.0
    %724 = vmatprep.subr.mxu0 0.0
    %725 = vmatpush1.msra.mxu0 0.0
    %726 = vmatprep.subr.mxu0 0.0
    %727 = vmatpush1.msra.mxu0 0.0
    %728 = vmatprep.subr.mxu0 0.0
    %729 = vmatpush1.msra.mxu0 0.0
    %730 = vmatprep.subr.mxu0 0.0
    %731 = vmatpush1.msra.mxu0 0.0
    %732 = vmatprep.subr.mxu0 0.0
    %733 = vmatpush1.msra.mxu0 0.0
    %734 = vmatprep.subr.mxu0 0.0
    %735 = vmatpush1.msra.mxu0 0.0
    %736 = vmatprep.subr.mxu0 0.0
    %737 = vmatpush1.msra.mxu0 0.0
    %738 = vmatprep.mubr.f32.mxu0 0.0
    %739 = vmatmul.mubr.f32.gmra.mrb[0].mxu0 %v649
    %v740 = vpop.f32.mrb[0].mxu0
    %v741 = vadd.f32 %v672, %v740
    %v742 = vpop.f32.mrb[0].mxu0
    %743 = vmatprep.mubr.f32.mxu0 0.0
    %744 = vmatmul.mubr.f32.gmra.mrb[0].mxu0 %v650
    %v745 = vpop.f32.mrb[0].mxu0
    %v746 = vadd.f32 %v672, %v745
    %v747 = vpop.f32.mrb[0].mxu0
    %748 = vdwg.mxu0
    %749 = vst [vmem:[#allocation11] sm:$0xff] %v741
    %750 = vst [vmem:[#allocation11 + $0x8] sm:$0xff] %v746
    // Predicated region
    $region58: #{tpu_custom_call.1} parent=1 // pred_check
      _
    $region59: #{tpu_custom_call.1} parent=1 // pred_check_branch
      %752 = sbr.rel (0) target = $region61
    $region60: #{tpu_custom_call.1} parent=1 // pred_region
      %s754 = ssub.s32 256, 256
      %755 = vsyncadd [#allocation4], %s754
      %s756 = sshll.u32 [#allocation11], 4
      %s757 = int_to_ptr.vmem [resolvable:$true] %s756
      %762 = dma.vmem_to_hbm [thread:$0]  %s757, 256, %s9, [#allocation4], 128, 128, 8
    $region61: #{tpu_custom_call.1} parent=1 // pred_fallthru
      _
    // Predicated region
    $region62: #{tpu_custom_call.1} parent=1 // pred_check
      _
    $region63: #{tpu_custom_call.1} parent=1 // pred_check_branch
      %764 = sbr.rel (0) target = $region65
    $region64: #{tpu_custom_call.1} parent=1 // pred_region
      %765 = dma.done [#allocation4], 256
    $region65: #{tpu_custom_call.1} parent=1 // pred_fallthru
      _
    %766 = vsyncpa [#allocation3], 1
    %767 = vsyncpa [#allocation6], 1
    %768 = vsyncpa [#allocation9], 1
    %769 = vsyncpa [#allocation4], 1

</llo_original>
